<compile_context>
chip_gen: v6e
topology: v6e:2x2x1
jax: 0.10.0
libtpu: 0.0.40
codegen_flags: <defaults>
</compile_context>

<pallas_src>
import functools
import math

import jax
import jax.numpy as jnp
from jax.experimental import pallas as pl
from jax.experimental.pallas import tpu as pltpu


# ----------------------------------------------------------------------------
# Fused Alignment + head kernel (one batch tile per grid step)
# ----------------------------------------------------------------------------
def _keh_fused_kernel(t2_ref, v2_ref, score_ref, kpm_ref, npmt_ref, npmc_ref,
                      pv_ref, prm_ref, hw_ref, scal_ref, y_ref, *,
                      lam, n_txt_layers, n_img_layers, apply_img_norm,
                      inv_sqrt_d):
    f32 = jnp.float32
    neg_inf = jnp.float32(-jnp.inf)

    # Packed parameters (hoisted broadcasts reused by every LN application).
    prm = prm_ref[...]                       # (4, D): [w1, w2, gamma, beta]
    w1_3d = prm[0:1, :].reshape(1, 1, -1)
    w2_3d = prm[1:2, :].reshape(1, 1, -1)
    w2_2d = prm[1:2, :]                      # (1, D)
    gamma = prm[2:3, :].reshape(1, 1, -1)
    beta = prm[3:4, :].reshape(1, 1, -1)
    b1 = scal_ref[0]                         # SMEM scalars
    b2 = scal_ref[1]
    bh0 = scal_ref[2]
    bh1 = scal_ref[3]

    # Streamed bf16 inputs -> f32 working copies (all math stays f32).
    t2 = t2_ref[...].astype(f32)             # (B, L, D)
    score = score_ref[...].astype(f32)       # (B, L, D)
    kpm = kpm_ref[...]                       # (B, L)   >0.5 == masked

    # c = sum_l score * t2  (score dead afterwards).
    c = jnp.sum(score * t2, axis=1)          # (B, D)

    # ---- branch 1: token softmax, then e1-weighted sum of t2 (no q1) ------
    pa1 = jnp.sum(t2 * w1_3d, axis=-1) + b1  # (B, L)  linear1 as lane-reduce
    if lam != 1.0:
        pa1 = pa1 * jnp.float32(lam)
    pa1 = jnp.where(kpm > 0.5, neg_inf, pa1)   # mask AFTER scaling (lam-safe)
    m1 = jnp.max(pa1, axis=1, keepdims=True)
    e1 = jnp.exp(pa1 - m1)                   # (B, L)
    s1 = jnp.sum(e1, axis=1, keepdims=True)  # (B, 1) exact denominator
    u1 = jnp.sum(e1[:, :, None] * t2, axis=1)            # (B, D)

    v2 = v2_ref[...].astype(f32)             # (B, K, D)
    # a1[b,k] = (u1[b,:] . v2[b,k,:]) / (s1 * sqrt(D))  -- VPU mul + lane reduce
    a1 = jnp.sum(u1[:, None, :] * v2, axis=-1) * (jnp.float32(inv_sqrt_d) / s1)

    # ---- GAT wrappers: relu + LayerNorm (message passing is identity) ------
    # TODO(synk): tg_conv.GATConv message passing over edge_index is an
    # external module; only the surrounding relu + LayerNorm is applied.
    def _layernorm(x):
        mu = jnp.mean(x, axis=-1, keepdims=True)
        var = jnp.mean(x * x, axis=-1, keepdims=True) - mu * mu   # one pass
        return (x - mu) * jax.lax.rsqrt(var + 1e-5) * gamma + beta

    tnp = t2
    for _ in range(n_txt_layers):
        tnp = _layernorm(jnp.maximum(tnp, 0.0))
    v3 = v2
    for _ in range(n_img_layers):
        v3 = jnp.maximum(v3, 0.0)
        if apply_img_norm:                   # is_knowledge == 0 branch
            v3 = _layernorm(v3)

    # ---- branch 2: (L+1) softmax with the context row folded separately ----
    pa2_tok = jnp.sum(tnp * w2_3d, axis=-1) + b2                  # (B, L)
    pa2_ctx = jnp.sum(c * w2_2d, axis=-1, keepdims=True) + b2     # (B, 1)
    if lam != 1.0:
        pa2_tok = pa2_tok * jnp.float32(lam)
        pa2_ctx = pa2_ctx * jnp.float32(lam)
    pa2_tok = jnp.where(npmt_ref[...] > 0.5, neg_inf, pa2_tok)
    pa2_ctx = jnp.where(npmc_ref[...] > 0.5, neg_inf, pa2_ctx)
    m2 = jnp.maximum(jnp.max(pa2_tok, axis=1, keepdims=True), pa2_ctx)
    e2 = jnp.exp(pa2_tok - m2)                                    # (B, L)
    e2c = jnp.exp(pa2_ctx - m2)                                   # (B, 1)
    s2 = jnp.sum(e2, axis=1, keepdims=True) + e2c                 # exact denom
    u2 = jnp.sum(e2[:, :, None] * tnp, axis=1) + e2c * c          # (B, D)
    a2 = jnp.sum(u2[:, None, :] * v3, axis=-1) * (jnp.float32(inv_sqrt_d) / s2)

    # ---- head: y = linear1([a1 ; a2] * [pv ; pv]) as 4 VPU lane-reduces ----
    pv = pv_ref[...]                          # (B, K)
    x1 = a1 * pv
    x2 = a2 * pv
    hw = hw_ref[...]                          # (4, K): [w1h_c0,w1h_c1,w2h_c0,w2h_c1]
    y0 = jnp.sum(x1 * hw[0:1, :] + x2 * hw[2:3, :], axis=-1, keepdims=True) + bh0
    y1 = jnp.sum(x1 * hw[1:2, :] + x2 * hw[3:4, :], axis=-1, keepdims=True) + bh1
    y_ref[...] = jnp.concatenate([y0, y1], axis=1).astype(y_ref.dtype)


# ----------------------------------------------------------------------------
# Batch-tile selection (VMEM-budgeted; grid >= 2 for >=16-row batches)
# ----------------------------------------------------------------------------
def _pick_batch_tile(n, l, d, k, vmem_budget_bytes=24 << 20):
    # Per-row bytes: bf16 streamed inputs (double-buffered) + f32 working set.
    per_row = (4 * (2 * l * d + k * d)                       # 2x bf16 DMA bufs
               + 4 * (4 * l * d + 2 * k * d + 8 * l + 4 * k))  # f32 live values
    bt = (vmem_budget_bytes // max(per_row, 1)) // 8 * 8
    bt = int(max(8, min(bt, 512)))
    n8 = ((n + 7) // 8) * 8
    if n8 >= 16:
        # Keep the grid >= 2 so the "parallel" axis can use both v7x TCs.
        half = (((n8 // 2) + 7) // 8) * 8
        bt = min(bt, half)
    bt = min(bt, n8)
    n_pad = ((n8 + bt - 1) // bt) * bt
    return bt, n_pad


# ----------------------------------------------------------------------------
# Wrapper (encoders / cross-modality are identity, see TODO above)
# ----------------------------------------------------------------------------
def keh_model_forward(params, *, texts, imgs, score, key_padding_mask, np_mask,
                      pv, lam=1.0, txt_gat_layer=2, img_gat_layer=2,
                      stream_dtype=jnp.bfloat16):
    """KEHModel_without_know.forward.  Returns y: (N, 2)."""
    N, L, D = texts.shape
    K = imgs.shape[1]

    bt, n_pad = _pick_batch_tile(N, L, D, K)

    def pad_b(x):
        p = n_pad - x.shape[0]
        if p == 0:
            return x
        return jnp.pad(x, ((0, p),) + ((0, 0),) * (x.ndim - 1))

    # Large streams go to HBM as bf16 (upcast to f32 inside the kernel).
    t2 = pad_b(texts).astype(stream_dtype)
    v2 = pad_b(imgs).astype(stream_dtype)
    sc = pad_b(score).astype(stream_dtype)
    pvp = pad_b(pv).astype(jnp.float32)
    kpm = pad_b(key_padding_mask.astype(jnp.float32))          # (n_pad, L)
    npm = pad_b(np_mask.astype(jnp.float32))                   # (n_pad, L+1)
    npm_tok = npm[:, :L]                                       # token rows
    npm_ctx = npm[:, L:L + 1]                                  # context row

    al = params["alignment"]
    hd = params["head"]
    # Packed parameter slabs: fewer input pipelines / no padded (1,1) tiles.
    prm = jnp.stack([al["w1"], al["w2"], al["gamma"], al["beta"]], axis=0)  # (4, D)
    hw = jnp.concatenate([hd["w"][:K].T, hd["w"][K:].T], axis=0)            # (4, K)
    scal = jnp.stack([al["b1"], al["b2"], hd["b"][0], hd["b"][1]])          # (4,)
    scal = scal.astype(jnp.float32)

    kernel = functools.partial(
        _keh_fused_kernel,
        lam=float(lam),
        n_txt_layers=txt_gat_layer,
        n_img_layers=img_gat_layer,
        apply_img_norm=True,                 # is_knowledge == 0
        inv_sqrt_d=1.0 / math.sqrt(D),
    )

    const2 = lambda b: (0, 0)
    y = pl.pallas_call(
        kernel,
        out_shape=jax.ShapeDtypeStruct((n_pad, 2), jnp.float32),
        grid=(n_pad // bt,),
        in_specs=[
            pl.BlockSpec((bt, L, D), lambda b: (b, 0, 0)),     # t2 (bf16)
            pl.BlockSpec((bt, K, D), lambda b: (b, 0, 0)),     # v2 (bf16)
            pl.BlockSpec((bt, L, D), lambda b: (b, 0, 0)),     # score (bf16)
            pl.BlockSpec((bt, L), lambda b: (b, 0)),           # key_padding_mask
            pl.BlockSpec((bt, L), lambda b: (b, 0)),           # np_mask (tokens)
            pl.BlockSpec((bt, 1), lambda b: (b, 0)),           # np_mask (context)
            pl.BlockSpec((bt, K), lambda b: (b, 0)),           # pv
            pl.BlockSpec((4, D), const2),                      # [w1;w2;gamma;beta]
            pl.BlockSpec((4, K), const2),                      # head weight slab
            pl.BlockSpec(memory_space=pltpu.MemorySpace.SMEM),  # [b1,b2,bh0,bh1]
        ],
        out_specs=pl.BlockSpec((bt, 2), lambda b: (b, 0)),
        compiler_params=pltpu.CompilerParams(
            dimension_semantics=("parallel",),
            vmem_limit_bytes=48 * 1024 * 1024),
    )(t2, v2, sc, kpm, npm_tok, npm_ctx, pvp, prm, hw, scal)
    return y[:N]


# ----------------------------------------------------------------------------
# Deterministic parameter init
# ----------------------------------------------------------------------------
def init_params(key, d, img_patch):
    k1, k2, k3 = jax.random.split(key, 3)
    return {
        "alignment": {
            "w1": jax.random.normal(k1, (d,), jnp.float32) * 0.1,   # linear1
            "b1": jnp.zeros((), jnp.float32),
            "w2": jax.random.normal(k2, (d,), jnp.float32) * 0.1,   # linear2
            "b2": jnp.zeros((), jnp.float32),
            "gamma": jnp.ones((d,), jnp.float32),                   # LayerNorm
            "beta": jnp.zeros((d,), jnp.float32),
        },
        "head": {
            "w": jax.random.normal(k3, (2 * img_patch, 2), jnp.float32) * 0.1,
            "b": jnp.zeros((2,), jnp.float32),
        },
    }


if __name__ == "__main__":
    # Small shapes consistent with the model's conventions.
    N, L, D = 2, 8, 32          # batch, text tokens, feature dim (img_out_dim)
    K = 8                       # img_patch (image tokens)

    root = jax.random.PRNGKey(0)
    keys = jax.random.split(root, 8)

    params = init_params(keys[0], D, K)

    texts = jax.random.normal(keys[1], (N, L, D), jnp.float32)
    imgs = jax.random.normal(keys[2], (N, K, D), jnp.float32)
    score = jax.nn.softmax(jax.random.normal(keys[3], (N, L, D), jnp.float32), axis=1)
    pv = jax.nn.softmax(jax.random.normal(keys[4], (N, K), jnp.float32), axis=1)

    # key_padding_mask (N, L): 1.0 means masked. Mask last 2 tokens of sample 1.
    kpm = jnp.zeros((N, L), jnp.float32).at[1, L - 2:].set(1.0)
    # np_mask (N, L+1): same positions masked; the appended context slot stays free.
    npm = jnp.zeros((N, L + 1), jnp.float32).at[1, L - 2:L].set(1.0)

    y = keh_model_forward(
        params, texts=texts, imgs=imgs, score=score,
        key_padding_mask=kpm, np_mask=npm, pv=pv, lam=1.0)
    y = jax.block_until_ready(y)
    assert y.shape == (N, 2) and bool(jnp.all(jnp.isfinite(y)))
    print("KERNEL_OK")
</pallas_src>

<mosaic_0001>
module attributes {stable_mosaic.version = 11 : i64} {
  func.func @_keh_fused_kernel(%arg0: i32, %arg1: memref<8x8x32xbf16, #tpu.memory_space<vmem>>, %arg2: memref<8x8x32xbf16, #tpu.memory_space<vmem>>, %arg3: memref<8x8x32xbf16, #tpu.memory_space<vmem>>, %arg4: memref<8x8xf32, #tpu.memory_space<vmem>>, %arg5: memref<8x8xf32, #tpu.memory_space<vmem>>, %arg6: memref<8x1xf32, #tpu.memory_space<vmem>>, %arg7: memref<8x8xf32, #tpu.memory_space<vmem>>, %arg8: memref<4x32xf32, #tpu.memory_space<vmem>>, %arg9: memref<4x8xf32, #tpu.memory_space<vmem>>, %arg10: memref<4xf32, #tpu.memory_space<smem>>, %arg11: memref<8x2xf32, #tpu.memory_space<vmem>>) attributes {dimension_semantics = [#tpu.dimension_semantics<parallel>], iteration_bounds = array<i64: 1>, scalar_prefetch = 0 : i64, scratch_operands = 0 : i64, tpu.core_type = #tpu.core_type<tc>, window_params = [{transform_indices = @transform_0, window_bounds = array<i64: 8, 8, 32>}, {transform_indices = @transform_1, window_bounds = array<i64: 8, 8, 32>}, {transform_indices = @transform_2, window_bounds = array<i64: 8, 8, 32>}, {transform_indices = @transform_3, window_bounds = array<i64: 8, 8>}, {transform_indices = @transform_4, window_bounds = array<i64: 8, 8>}, {transform_indices = @transform_5, window_bounds = array<i64: 8, 1>}, {transform_indices = @transform_6, window_bounds = array<i64: 8, 8>}, {pipeline_mode = #tpu.pipeline_mode<synchronous>, transform_indices = @transform_7, window_bounds = array<i64: 4, 32>}, {pipeline_mode = #tpu.pipeline_mode<synchronous>, transform_indices = @transform_8, window_bounds = array<i64: 4, 8>}, {transform_indices = @transform_9, window_bounds = array<i64: 4>}, {transform_indices = @transform_10, window_bounds = array<i64: 8, 2>}]} {
    %c0 = arith.constant 0 : index
    %c0_0 = arith.constant 0 : index
    %0 = vector.load %arg8[%c0, %c0_0] : memref<4x32xf32, #tpu.memory_space<vmem>>, vector<4x32xf32>
    %1 = vector.extract_strided_slice %0 {offsets = [0, 0], sizes = [1, 32], strides = [1, 1]} : vector<4x32xf32> to vector<1x32xf32>
    %2 = vector.shape_cast %1 : vector<1x32xf32> to vector<1x1x32xf32>
    %3 = vector.extract_strided_slice %0 {offsets = [1, 0], sizes = [1, 32], strides = [1, 1]} : vector<4x32xf32> to vector<1x32xf32>
    %4 = vector.shape_cast %3 : vector<1x32xf32> to vector<1x1x32xf32>
    %5 = vector.extract_strided_slice %0 {offsets = [1, 0], sizes = [1, 32], strides = [1, 1]} : vector<4x32xf32> to vector<1x32xf32>
    %6 = vector.extract_strided_slice %0 {offsets = [2, 0], sizes = [1, 32], strides = [1, 1]} : vector<4x32xf32> to vector<1x32xf32>
    %7 = vector.shape_cast %6 : vector<1x32xf32> to vector<1x1x32xf32>
    %8 = vector.extract_strided_slice %0 {offsets = [3, 0], sizes = [1, 32], strides = [1, 1]} : vector<4x32xf32> to vector<1x32xf32>
    %9 = vector.shape_cast %8 : vector<1x32xf32> to vector<1x1x32xf32>
    %c0_1 = arith.constant 0 : index
    %10 = memref.load %arg10[%c0_1] : memref<4xf32, #tpu.memory_space<smem>>
    %c1 = arith.constant 1 : index
    %11 = memref.load %arg10[%c1] : memref<4xf32, #tpu.memory_space<smem>>
    %c2 = arith.constant 2 : index
    %12 = memref.load %arg10[%c2] : memref<4xf32, #tpu.memory_space<smem>>
    %c3 = arith.constant 3 : index
    %13 = memref.load %arg10[%c3] : memref<4xf32, #tpu.memory_space<smem>>
    %c0_2 = arith.constant 0 : index
    %c0_3 = arith.constant 0 : index
    %c0_4 = arith.constant 0 : index
    %14 = vector.load %arg1[%c0_2, %c0_3, %c0_4] : memref<8x8x32xbf16, #tpu.memory_space<vmem>>, vector<8x8x32xbf16>
    %15 = arith.extf %14 : vector<8x8x32xbf16> to vector<8x8x32xf32>
    %c0_5 = arith.constant 0 : index
    %c0_6 = arith.constant 0 : index
    %c0_7 = arith.constant 0 : index
    %16 = vector.load %arg3[%c0_5, %c0_6, %c0_7] : memref<8x8x32xbf16, #tpu.memory_space<vmem>>, vector<8x8x32xbf16>
    %17 = arith.extf %16 : vector<8x8x32xbf16> to vector<8x8x32xf32>
    %c0_8 = arith.constant 0 : index
    %c0_9 = arith.constant 0 : index
    %18 = vector.load %arg4[%c0_8, %c0_9] : memref<8x8xf32, #tpu.memory_space<vmem>>, vector<8x8xf32>
    %19 = arith.mulf %17, %15 : vector<8x8x32xf32>
    %cst = arith.constant dense<0.000000e+00> : vector<8x32xf32>
    %20 = vector.multi_reduction <add>, %19, %cst [1] : vector<8x8x32xf32> to vector<8x32xf32>
    %21 = vector.broadcast %2 : vector<1x1x32xf32> to vector<8x8x32xf32>
    %22 = arith.mulf %15, %21 : vector<8x8x32xf32>
    %cst_10 = arith.constant dense<0.000000e+00> : vector<8x8xf32>
    %23 = vector.multi_reduction <add>, %22, %cst_10 [2] : vector<8x8x32xf32> to vector<8x8xf32>
    %24 = vector.broadcast %10 : f32 to vector<8x8xf32>
    %25 = arith.addf %23, %24 : vector<8x8xf32>
    %cst_11 = arith.constant 5.000000e-01 : f32
    %26 = vector.broadcast %cst_11 : f32 to vector<8x8xf32>
    %27 = arith.cmpf ogt, %18, %26 : vector<8x8xf32>
    %cst_12 = arith.constant 0xFF800000 : f32
    %28 = vector.broadcast %cst_12 : f32 to vector<8x8xf32>
    %29 = arith.select %27, %28, %25 : vector<8x8xi1>, vector<8x8xf32>
    %cst_13 = arith.constant dense<0xFF800000> : vector<8xf32>
    %30 = vector.multi_reduction <maximumf>, %29, %cst_13 [1] : vector<8x8xf32> to vector<8xf32>
    %31 = vector.shape_cast %30 : vector<8xf32> to vector<8x1xf32>
    %32 = vector.broadcast %31 : vector<8x1xf32> to vector<8x8xf32>
    %33 = arith.subf %29, %32 : vector<8x8xf32>
    %34 = math.exp %33 : vector<8x8xf32>
    %cst_14 = arith.constant dense<0.000000e+00> : vector<8xf32>
    %35 = vector.multi_reduction <add>, %34, %cst_14 [1] : vector<8x8xf32> to vector<8xf32>
    %36 = vector.shape_cast %35 : vector<8xf32> to vector<8x1xf32>
    %37 = vector.shape_cast %34 : vector<8x8xf32> to vector<8x8x1xf32>
    %38 = vector.broadcast %37 : vector<8x8x1xf32> to vector<8x8x32xf32>
    %39 = arith.mulf %38, %15 : vector<8x8x32xf32>
    %cst_15 = arith.constant dense<0.000000e+00> : vector<8x32xf32>
    %40 = vector.multi_reduction <add>, %39, %cst_15 [1] : vector<8x8x32xf32> to vector<8x32xf32>
    %c0_16 = arith.constant 0 : index
    %c0_17 = arith.constant 0 : index
    %c0_18 = arith.constant 0 : index
    %41 = vector.load %arg2[%c0_16, %c0_17, %c0_18] : memref<8x8x32xbf16, #tpu.memory_space<vmem>>, vector<8x8x32xbf16>
    %42 = arith.extf %41 : vector<8x8x32xbf16> to vector<8x8x32xf32>
    %43 = vector.shape_cast %40 : vector<8x32xf32> to vector<8x1x32xf32>
    %44 = vector.broadcast %43 : vector<8x1x32xf32> to vector<8x8x32xf32>
    %45 = arith.mulf %44, %42 : vector<8x8x32xf32>
    %cst_19 = arith.constant dense<0.000000e+00> : vector<8x8xf32>
    %46 = vector.multi_reduction <add>, %45, %cst_19 [2] : vector<8x8x32xf32> to vector<8x8xf32>
    %cst_20 = arith.constant 0.176776692 : f32
    %47 = vector.broadcast %cst_20 : f32 to vector<8x1xf32>
    %48 = arith.divf %47, %36 : vector<8x1xf32>
    %49 = vector.broadcast %48 : vector<8x1xf32> to vector<8x8xf32>
    %50 = arith.mulf %46, %49 : vector<8x8xf32>
    %cst_21 = arith.constant 0.000000e+00 : f32
    %51 = vector.broadcast %cst_21 : f32 to vector<8x8x32xf32>
    %52 = arith.maximumf %15, %51 : vector<8x8x32xf32>
    %cst_22 = arith.constant dense<0.000000e+00> : vector<8x8xf32>
    %53 = vector.multi_reduction <add>, %52, %cst_22 [2] : vector<8x8x32xf32> to vector<8x8xf32>
    %54 = vector.shape_cast %53 : vector<8x8xf32> to vector<8x8x1xf32>
    %cst_23 = arith.constant 3.200000e+01 : f32
    %55 = vector.broadcast %cst_23 : f32 to vector<8x8x1xf32>
    %56 = arith.divf %54, %55 : vector<8x8x1xf32>
    %57 = arith.mulf %52, %52 : vector<8x8x32xf32>
    %cst_24 = arith.constant dense<0.000000e+00> : vector<8x8xf32>
    %58 = vector.multi_reduction <add>, %57, %cst_24 [2] : vector<8x8x32xf32> to vector<8x8xf32>
    %59 = vector.shape_cast %58 : vector<8x8xf32> to vector<8x8x1xf32>
    %cst_25 = arith.constant 3.200000e+01 : f32
    %60 = vector.broadcast %cst_25 : f32 to vector<8x8x1xf32>
    %61 = arith.divf %59, %60 : vector<8x8x1xf32>
    %62 = arith.mulf %56, %56 : vector<8x8x1xf32>
    %63 = arith.subf %61, %62 : vector<8x8x1xf32>
    %64 = vector.broadcast %56 : vector<8x8x1xf32> to vector<8x8x32xf32>
    %65 = arith.subf %52, %64 : vector<8x8x32xf32>
    %cst_26 = arith.constant 9.99999974E-6 : f32
    %66 = vector.broadcast %cst_26 : f32 to vector<8x8x1xf32>
    %67 = arith.addf %63, %66 : vector<8x8x1xf32>
    %68 = math.rsqrt %67 : vector<8x8x1xf32>
    %69 = vector.broadcast %68 : vector<8x8x1xf32> to vector<8x8x32xf32>
    %70 = arith.mulf %65, %69 : vector<8x8x32xf32>
    %71 = vector.broadcast %7 : vector<1x1x32xf32> to vector<8x8x32xf32>
    %72 = arith.mulf %70, %71 : vector<8x8x32xf32>
    %73 = vector.broadcast %9 : vector<1x1x32xf32> to vector<8x8x32xf32>
    %74 = arith.addf %72, %73 : vector<8x8x32xf32>
    %cst_27 = arith.constant 0.000000e+00 : f32
    %75 = vector.broadcast %cst_27 : f32 to vector<8x8x32xf32>
    %76 = arith.maximumf %74, %75 : vector<8x8x32xf32>
    %cst_28 = arith.constant dense<0.000000e+00> : vector<8x8xf32>
    %77 = vector.multi_reduction <add>, %76, %cst_28 [2] : vector<8x8x32xf32> to vector<8x8xf32>
    %78 = vector.shape_cast %77 : vector<8x8xf32> to vector<8x8x1xf32>
    %cst_29 = arith.constant 3.200000e+01 : f32
    %79 = vector.broadcast %cst_29 : f32 to vector<8x8x1xf32>
    %80 = arith.divf %78, %79 : vector<8x8x1xf32>
    %81 = arith.mulf %76, %76 : vector<8x8x32xf32>
    %cst_30 = arith.constant dense<0.000000e+00> : vector<8x8xf32>
    %82 = vector.multi_reduction <add>, %81, %cst_30 [2] : vector<8x8x32xf32> to vector<8x8xf32>
    %83 = vector.shape_cast %82 : vector<8x8xf32> to vector<8x8x1xf32>
    %cst_31 = arith.constant 3.200000e+01 : f32
    %84 = vector.broadcast %cst_31 : f32 to vector<8x8x1xf32>
    %85 = arith.divf %83, %84 : vector<8x8x1xf32>
    %86 = arith.mulf %80, %80 : vector<8x8x1xf32>
    %87 = arith.subf %85, %86 : vector<8x8x1xf32>
    %88 = vector.broadcast %80 : vector<8x8x1xf32> to vector<8x8x32xf32>
    %89 = arith.subf %76, %88 : vector<8x8x32xf32>
    %cst_32 = arith.constant 9.99999974E-6 : f32
    %90 = vector.broadcast %cst_32 : f32 to vector<8x8x1xf32>
    %91 = arith.addf %87, %90 : vector<8x8x1xf32>
    %92 = math.rsqrt %91 : vector<8x8x1xf32>
    %93 = vector.broadcast %92 : vector<8x8x1xf32> to vector<8x8x32xf32>
    %94 = arith.mulf %89, %93 : vector<8x8x32xf32>
    %95 = vector.broadcast %7 : vector<1x1x32xf32> to vector<8x8x32xf32>
    %96 = arith.mulf %94, %95 : vector<8x8x32xf32>
    %97 = vector.broadcast %9 : vector<1x1x32xf32> to vector<8x8x32xf32>
    %98 = arith.addf %96, %97 : vector<8x8x32xf32>
    %cst_33 = arith.constant 0.000000e+00 : f32
    %99 = vector.broadcast %cst_33 : f32 to vector<8x8x32xf32>
    %100 = arith.maximumf %42, %99 : vector<8x8x32xf32>
    %cst_34 = arith.constant dense<0.000000e+00> : vector<8x8xf32>
    %101 = vector.multi_reduction <add>, %100, %cst_34 [2] : vector<8x8x32xf32> to vector<8x8xf32>
    %102 = vector.shape_cast %101 : vector<8x8xf32> to vector<8x8x1xf32>
    %cst_35 = arith.constant 3.200000e+01 : f32
    %103 = vector.broadcast %cst_35 : f32 to vector<8x8x1xf32>
    %104 = arith.divf %102, %103 : vector<8x8x1xf32>
    %105 = arith.mulf %100, %100 : vector<8x8x32xf32>
    %cst_36 = arith.constant dense<0.000000e+00> : vector<8x8xf32>
    %106 = vector.multi_reduction <add>, %105, %cst_36 [2] : vector<8x8x32xf32> to vector<8x8xf32>
    %107 = vector.shape_cast %106 : vector<8x8xf32> to vector<8x8x1xf32>
    %cst_37 = arith.constant 3.200000e+01 : f32
    %108 = vector.broadcast %cst_37 : f32 to vector<8x8x1xf32>
    %109 = arith.divf %107, %108 : vector<8x8x1xf32>
    %110 = arith.mulf %104, %104 : vector<8x8x1xf32>
    %111 = arith.subf %109, %110 : vector<8x8x1xf32>
    %112 = vector.broadcast %104 : vector<8x8x1xf32> to vector<8x8x32xf32>
    %113 = arith.subf %100, %112 : vector<8x8x32xf32>
    %cst_38 = arith.constant 9.99999974E-6 : f32
    %114 = vector.broadcast %cst_38 : f32 to vector<8x8x1xf32>
    %115 = arith.addf %111, %114 : vector<8x8x1xf32>
    %116 = math.rsqrt %115 : vector<8x8x1xf32>
    %117 = vector.broadcast %116 : vector<8x8x1xf32> to vector<8x8x32xf32>
    %118 = arith.mulf %113, %117 : vector<8x8x32xf32>
    %119 = vector.broadcast %7 : vector<1x1x32xf32> to vector<8x8x32xf32>
    %120 = arith.mulf %118, %119 : vector<8x8x32xf32>
    %121 = vector.broadcast %9 : vector<1x1x32xf32> to vector<8x8x32xf32>
    %122 = arith.addf %120, %121 : vector<8x8x32xf32>
    %cst_39 = arith.constant 0.000000e+00 : f32
    %123 = vector.broadcast %cst_39 : f32 to vector<8x8x32xf32>
    %124 = arith.maximumf %122, %123 : vector<8x8x32xf32>
    %cst_40 = arith.constant dense<0.000000e+00> : vector<8x8xf32>
    %125 = vector.multi_reduction <add>, %124, %cst_40 [2] : vector<8x8x32xf32> to vector<8x8xf32>
    %126 = vector.shape_cast %125 : vector<8x8xf32> to vector<8x8x1xf32>
    %cst_41 = arith.constant 3.200000e+01 : f32
    %127 = vector.broadcast %cst_41 : f32 to vector<8x8x1xf32>
    %128 = arith.divf %126, %127 : vector<8x8x1xf32>
    %129 = arith.mulf %124, %124 : vector<8x8x32xf32>
    %cst_42 = arith.constant dense<0.000000e+00> : vector<8x8xf32>
    %130 = vector.multi_reduction <add>, %129, %cst_42 [2] : vector<8x8x32xf32> to vector<8x8xf32>
    %131 = vector.shape_cast %130 : vector<8x8xf32> to vector<8x8x1xf32>
    %cst_43 = arith.constant 3.200000e+01 : f32
    %132 = vector.broadcast %cst_43 : f32 to vector<8x8x1xf32>
    %133 = arith.divf %131, %132 : vector<8x8x1xf32>
    %134 = arith.mulf %128, %128 : vector<8x8x1xf32>
    %135 = arith.subf %133, %134 : vector<8x8x1xf32>
    %136 = vector.broadcast %128 : vector<8x8x1xf32> to vector<8x8x32xf32>
    %137 = arith.subf %124, %136 : vector<8x8x32xf32>
    %cst_44 = arith.constant 9.99999974E-6 : f32
    %138 = vector.broadcast %cst_44 : f32 to vector<8x8x1xf32>
    %139 = arith.addf %135, %138 : vector<8x8x1xf32>
    %140 = math.rsqrt %139 : vector<8x8x1xf32>
    %141 = vector.broadcast %140 : vector<8x8x1xf32> to vector<8x8x32xf32>
    %142 = arith.mulf %137, %141 : vector<8x8x32xf32>
    %143 = vector.broadcast %7 : vector<1x1x32xf32> to vector<8x8x32xf32>
    %144 = arith.mulf %142, %143 : vector<8x8x32xf32>
    %145 = vector.broadcast %9 : vector<1x1x32xf32> to vector<8x8x32xf32>
    %146 = arith.addf %144, %145 : vector<8x8x32xf32>
    %147 = vector.broadcast %4 : vector<1x1x32xf32> to vector<8x8x32xf32>
    %148 = arith.mulf %98, %147 : vector<8x8x32xf32>
    %cst_45 = arith.constant dense<0.000000e+00> : vector<8x8xf32>
    %149 = vector.multi_reduction <add>, %148, %cst_45 [2] : vector<8x8x32xf32> to vector<8x8xf32>
    %150 = vector.broadcast %11 : f32 to vector<8x8xf32>
    %151 = arith.addf %149, %150 : vector<8x8xf32>
    %152 = vector.broadcast %5 : vector<1x32xf32> to vector<8x32xf32>
    %153 = arith.mulf %20, %152 : vector<8x32xf32>
    %cst_46 = arith.constant dense<0.000000e+00> : vector<8xf32>
    %154 = vector.multi_reduction <add>, %153, %cst_46 [1] : vector<8x32xf32> to vector<8xf32>
    %155 = vector.shape_cast %154 : vector<8xf32> to vector<8x1xf32>
    %156 = vector.broadcast %11 : f32 to vector<8x1xf32>
    %157 = arith.addf %155, %156 : vector<8x1xf32>
    %c0_47 = arith.constant 0 : index
    %c0_48 = arith.constant 0 : index
    %158 = vector.load %arg5[%c0_47, %c0_48] : memref<8x8xf32, #tpu.memory_space<vmem>>, vector<8x8xf32>
    %cst_49 = arith.constant 5.000000e-01 : f32
    %159 = vector.broadcast %cst_49 : f32 to vector<8x8xf32>
    %160 = arith.cmpf ogt, %158, %159 : vector<8x8xf32>
    %cst_50 = arith.constant 0xFF800000 : f32
    %161 = vector.broadcast %cst_50 : f32 to vector<8x8xf32>
    %162 = arith.select %160, %161, %151 : vector<8x8xi1>, vector<8x8xf32>
    %c0_51 = arith.constant 0 : index
    %c0_52 = arith.constant 0 : index
    %163 = vector.load %arg6[%c0_51, %c0_52] : memref<8x1xf32, #tpu.memory_space<vmem>>, vector<8x1xf32>
    %cst_53 = arith.constant 5.000000e-01 : f32
    %164 = vector.broadcast %cst_53 : f32 to vector<8x1xf32>
    %165 = arith.cmpf ogt, %163, %164 : vector<8x1xf32>
    %cst_54 = arith.constant 0xFF800000 : f32
    %166 = vector.broadcast %cst_54 : f32 to vector<8x1xf32>
    %167 = arith.select %165, %166, %157 : vector<8x1xi1>, vector<8x1xf32>
    %cst_55 = arith.constant dense<0xFF800000> : vector<8xf32>
    %168 = vector.multi_reduction <maximumf>, %162, %cst_55 [1] : vector<8x8xf32> to vector<8xf32>
    %169 = vector.shape_cast %168 : vector<8xf32> to vector<8x1xf32>
    %170 = arith.maximumf %169, %167 : vector<8x1xf32>
    %171 = vector.broadcast %170 : vector<8x1xf32> to vector<8x8xf32>
    %172 = arith.subf %162, %171 : vector<8x8xf32>
    %173 = math.exp %172 : vector<8x8xf32>
    %174 = arith.subf %167, %170 : vector<8x1xf32>
    %175 = math.exp %174 : vector<8x1xf32>
    %cst_56 = arith.constant dense<0.000000e+00> : vector<8xf32>
    %176 = vector.multi_reduction <add>, %173, %cst_56 [1] : vector<8x8xf32> to vector<8xf32>
    %177 = vector.shape_cast %176 : vector<8xf32> to vector<8x1xf32>
    %178 = arith.addf %177, %175 : vector<8x1xf32>
    %179 = vector.shape_cast %173 : vector<8x8xf32> to vector<8x8x1xf32>
    %180 = vector.broadcast %179 : vector<8x8x1xf32> to vector<8x8x32xf32>
    %181 = arith.mulf %180, %98 : vector<8x8x32xf32>
    %cst_57 = arith.constant dense<0.000000e+00> : vector<8x32xf32>
    %182 = vector.multi_reduction <add>, %181, %cst_57 [1] : vector<8x8x32xf32> to vector<8x32xf32>
    %183 = vector.broadcast %175 : vector<8x1xf32> to vector<8x32xf32>
    %184 = arith.mulf %183, %20 : vector<8x32xf32>
    %185 = arith.addf %182, %184 : vector<8x32xf32>
    %186 = vector.shape_cast %185 : vector<8x32xf32> to vector<8x1x32xf32>
    %187 = vector.broadcast %186 : vector<8x1x32xf32> to vector<8x8x32xf32>
    %188 = arith.mulf %187, %146 : vector<8x8x32xf32>
    %cst_58 = arith.constant dense<0.000000e+00> : vector<8x8xf32>
    %189 = vector.multi_reduction <add>, %188, %cst_58 [2] : vector<8x8x32xf32> to vector<8x8xf32>
    %cst_59 = arith.constant 0.176776692 : f32
    %190 = vector.broadcast %cst_59 : f32 to vector<8x1xf32>
    %191 = arith.divf %190, %178 : vector<8x1xf32>
    %192 = vector.broadcast %191 : vector<8x1xf32> to vector<8x8xf32>
    %193 = arith.mulf %189, %192 : vector<8x8xf32>
    %c0_60 = arith.constant 0 : index
    %c0_61 = arith.constant 0 : index
    %194 = vector.load %arg7[%c0_60, %c0_61] : memref<8x8xf32, #tpu.memory_space<vmem>>, vector<8x8xf32>
    %195 = arith.mulf %50, %194 : vector<8x8xf32>
    %196 = arith.mulf %193, %194 : vector<8x8xf32>
    %c0_62 = arith.constant 0 : index
    %c0_63 = arith.constant 0 : index
    %197 = vector.load %arg9[%c0_62, %c0_63] : memref<4x8xf32, #tpu.memory_space<vmem>>, vector<4x8xf32>
    %198 = vector.extract_strided_slice %197 {offsets = [0, 0], sizes = [1, 8], strides = [1, 1]} : vector<4x8xf32> to vector<1x8xf32>
    %199 = vector.broadcast %198 : vector<1x8xf32> to vector<8x8xf32>
    %200 = arith.mulf %195, %199 : vector<8x8xf32>
    %201 = vector.extract_strided_slice %197 {offsets = [2, 0], sizes = [1, 8], strides = [1, 1]} : vector<4x8xf32> to vector<1x8xf32>
    %202 = vector.broadcast %201 : vector<1x8xf32> to vector<8x8xf32>
    %203 = arith.mulf %196, %202 : vector<8x8xf32>
    %204 = arith.addf %200, %203 : vector<8x8xf32>
    %cst_64 = arith.constant dense<0.000000e+00> : vector<8xf32>
    %205 = vector.multi_reduction <add>, %204, %cst_64 [1] : vector<8x8xf32> to vector<8xf32>
    %206 = vector.shape_cast %205 : vector<8xf32> to vector<8x1xf32>
    %207 = vector.broadcast %12 : f32 to vector<8x1xf32>
    %208 = arith.addf %206, %207 : vector<8x1xf32>
    %209 = vector.extract_strided_slice %197 {offsets = [1, 0], sizes = [1, 8], strides = [1, 1]} : vector<4x8xf32> to vector<1x8xf32>
    %210 = vector.broadcast %209 : vector<1x8xf32> to vector<8x8xf32>
    %211 = arith.mulf %195, %210 : vector<8x8xf32>
    %212 = vector.extract_strided_slice %197 {offsets = [3, 0], sizes = [1, 8], strides = [1, 1]} : vector<4x8xf32> to vector<1x8xf32>
    %213 = vector.broadcast %212 : vector<1x8xf32> to vector<8x8xf32>
    %214 = arith.mulf %196, %213 : vector<8x8xf32>
    %215 = arith.addf %211, %214 : vector<8x8xf32>
    %cst_65 = arith.constant dense<0.000000e+00> : vector<8xf32>
    %216 = vector.multi_reduction <add>, %215, %cst_65 [1] : vector<8x8xf32> to vector<8xf32>
    %217 = vector.shape_cast %216 : vector<8xf32> to vector<8x1xf32>
    %218 = vector.broadcast %13 : f32 to vector<8x1xf32>
    %219 = arith.addf %217, %218 : vector<8x1xf32>
    %220 = tpu.concatenate %208, %219 in 1 : vector<8x1xf32>, vector<8x1xf32> -> vector<8x2xf32>
    %c0_66 = arith.constant 0 : index
    %c0_67 = arith.constant 0 : index
    %221 = vector.load %arg11[%c0_66, %c0_67] : memref<8x2xf32, #tpu.memory_space<vmem>>, vector<8x2xf32>
    tpu.vector_store %arg11[%c0_66, %c0_67], %220 {strides = array<i32>} : memref<8x2xf32, #tpu.memory_space<vmem>>, vector<8x2xf32>,
    return
  }
  func.func @transform_0(%arg0: i32) -> (i32, i32, i32) {
    %c0_i32 = arith.constant 0 : i32
    %c0_i32_0 = arith.constant 0 : i32
    %c0_i32_1 = arith.constant 0 : i32
    return %arg0, %c0_i32, %c0_i32_0 : i32, i32, i32
  }
  func.func @transform_1(%arg0: i32) -> (i32, i32, i32) {
    %c0_i32 = arith.constant 0 : i32
    %c0_i32_0 = arith.constant 0 : i32
    %c0_i32_1 = arith.constant 0 : i32
    return %arg0, %c0_i32, %c0_i32_0 : i32, i32, i32
  }
  func.func @transform_2(%arg0: i32) -> (i32, i32, i32) {
    %c0_i32 = arith.constant 0 : i32
    %c0_i32_0 = arith.constant 0 : i32
    %c0_i32_1 = arith.constant 0 : i32
    return %arg0, %c0_i32, %c0_i32_0 : i32, i32, i32
  }
  func.func @transform_3(%arg0: i32) -> (i32, i32) {
    %c0_i32 = arith.constant 0 : i32
    %c0_i32_0 = arith.constant 0 : i32
    return %arg0, %c0_i32 : i32, i32
  }
  func.func @transform_4(%arg0: i32) -> (i32, i32) {
    %c0_i32 = arith.constant 0 : i32
    %c0_i32_0 = arith.constant 0 : i32
    return %arg0, %c0_i32 : i32, i32
  }
  func.func @transform_5(%arg0: i32) -> (i32, i32) {
    %c0_i32 = arith.constant 0 : i32
    %c0_i32_0 = arith.constant 0 : i32
    return %arg0, %c0_i32 : i32, i32
  }
  func.func @transform_6(%arg0: i32) -> (i32, i32) {
    %c0_i32 = arith.constant 0 : i32
    %c0_i32_0 = arith.constant 0 : i32
    return %arg0, %c0_i32 : i32, i32
  }
  func.func @transform_7(%arg0: i32) -> (i32, i32) {
    %c0_i32 = arith.constant 0 : i32
    %c0_i32_0 = arith.constant 0 : i32
    %c0_i32_1 = arith.constant 0 : i32
    return %c0_i32, %c0_i32_0 : i32, i32
  }
  func.func @transform_8(%arg0: i32) -> (i32, i32) {
    %c0_i32 = arith.constant 0 : i32
    %c0_i32_0 = arith.constant 0 : i32
    %c0_i32_1 = arith.constant 0 : i32
    return %c0_i32, %c0_i32_0 : i32, i32
  }
  func.func @transform_9(%arg0: i32) -> i32 {
    %c0_i32 = arith.constant 0 : i32
    %c0_i32_0 = arith.constant 0 : i32
    return %c0_i32 : i32
  }
  func.func @transform_10(%arg0: i32) -> (i32, i32) {
    %c0_i32 = arith.constant 0 : i32
    %c0_i32_0 = arith.constant 0 : i32
    return %arg0, %c0_i32 : i32, i32
  }
}

</mosaic_0001>

<llo_original>
// kernel: tpu_custom_call.1
$region0: #{tpu_custom_call.1}
  #allocation0 [shape = 'u32[]', space=smem, size = 0x4, offset = 0x4, fixed_abs, tag = 'smem constant byte address 0x4 - core index']
  #allocation1 [shape = 'u32[144,128]{1,0:T(1,128)}', space=vmem, size = 0x12000, scoped, tag = 'internal scratch']
  %s0 = inlined_call_operand.hbm [shape: bf16[8,8,32], index: 0, kind: input, shape index: {}]
  %s1 = inlined_call_operand.hbm [shape: bf16[8,8,32], index: 1, kind: input, shape index: {}]
  %s2 = inlined_call_operand.hbm [shape: bf16[8,8,32], index: 2, kind: input, shape index: {}]
  %s3 = inlined_call_operand.vmem [shape: f32[8,8], index: 3, kind: input, shape index: {}]
  %s4 = inlined_call_operand.vmem [shape: f32[8,8], index: 4, kind: input, shape index: {}]
  %s5 = inlined_call_operand.vmem [shape: f32[8,1], index: 5, kind: input, shape index: {}]
  %s6 = inlined_call_operand.hbm [shape: f32[8,8], index: 6, kind: input, shape index: {}]
  %s7 = inlined_call_operand.vmem [shape: f32[4,32], index: 7, kind: input, shape index: {}]
  %s8 = inlined_call_operand.hbm [shape: f32[4,8], index: 8, kind: input, shape index: {}]
  %s9 = inlined_call_operand.vmem [shape: f32[4], index: 9, kind: input, shape index: {}]
  %s10 = inlined_call_operand.vmem [shape: f32[8,2], index: 10, kind: output, shape index: {}]
  %s11 = sld [smem:[#allocation0]]
  $region74: #{tpu_custom_call.1} parent=0
    _
  %s13 = ssub.s32 1, %s11
  %s14 = scalar_select 0, %s13, %s11
  $region1: #{tpu_custom_call.1} parent=0
    #allocation2 [shape = 'u8[16384]{0}', space=vmem, size = 0x4000, scoped, tag = 'input window, operand 0, single buffered']
    #allocation3 [shape = 's32[1]{0}', space=sflag, size = 0x4, scoped, tag = 'scoped memory for tpu_custom_call.1']
    #allocation4 [shape = 's32[1]{0}', space=sflag, size = 0x4, scoped, tag = 'scoped memory for tpu_custom_call.1']
    #allocation5 [shape = 'u8[16384]{0}', space=vmem, size = 0x4000, scoped, tag = 'input window, operand 1, single buffered']
    #allocation6 [shape = 's32[1]{0}', space=sflag, size = 0x4, scoped, tag = 'scoped memory for tpu_custom_call.1']
    #allocation7 [shape = 'u8[16384]{0}', space=vmem, size = 0x4000, scoped, tag = 'input window, operand 2, single buffered']
    #allocation8 [shape = 'u8[4096]{0}', space=vmem, size = 0x1000, scoped, tag = 'input window, operand 6, single buffered']
    #allocation9 [shape = 's32[1]{0}', space=sflag, size = 0x4, scoped, tag = 'scoped memory for tpu_custom_call.1']
    #allocation10 [shape = 'u8[2048]{0}', space=vmem, size = 0x800, scoped, tag = 'input window, operand 8, single buffered']
    #allocation11 [shape = 'u8[512]{0}', space=smem, size = 0x200, scoped, tag = 'input window, operand 9, single buffered']
    %15 = vsyncpa [#allocation3], 0
    %16 = vsyncpa [#allocation6], 0
    %17 = vsyncpa [#allocation9], 0
    %18 = vsyncpa [#allocation4], 0
    // Predicated region
    $region2: #{tpu_custom_call.1} parent=1 // pred_check
      _
    $region3: #{tpu_custom_call.1} parent=1 // pred_check_branch
      %20 = sbr.rel (0) target = $region5
    $region4: #{tpu_custom_call.1} parent=1 // pred_region
      %s22 = ssub.s32 512, 512
      %23 = vsyncadd [#allocation3], %s22
      %s24 = sshll.u32 [#allocation2], 4
      %s25 = int_to_ptr.vmem [resolvable:$true] %s24
      %30 = dma.hbm_to_vmem [thread:$0]  %s0, 512, %s25, [#allocation3], 64, 64, 4
    $region5: #{tpu_custom_call.1} parent=1 // pred_fallthru
      _
    // Predicated region
    $region6: #{tpu_custom_call.1} parent=1 // pred_check
      _
    $region7: #{tpu_custom_call.1} parent=1 // pred_check_branch
      %32 = sbr.rel (0) target = $region9
    $region8: #{tpu_custom_call.1} parent=1 // pred_region
      %s34 = ssub.s32 512, 512
      %35 = vsyncadd [#allocation6], %s34
      %s36 = sshll.u32 [#allocation5], 4
      %s37 = int_to_ptr.vmem [resolvable:$true] %s36
      %42 = dma.hbm_to_vmem [thread:$0]  %s1, 512, %s37, [#allocation6], 64, 64, 4
    $region9: #{tpu_custom_call.1} parent=1 // pred_fallthru
      _
    // Predicated region
    $region10: #{tpu_custom_call.1} parent=1 // pred_check
      _
    $region11: #{tpu_custom_call.1} parent=1 // pred_check_branch
      %44 = sbr.rel (0) target = $region13
    $region12: #{tpu_custom_call.1} parent=1 // pred_region
      %s46 = ssub.s32 512, 512
      %47 = vsyncadd [#allocation6], %s46
      %s48 = sshll.u32 [#allocation7], 4
      %s49 = int_to_ptr.vmem [resolvable:$true] %s48
      %54 = dma.hbm_to_vmem [thread:$0]  %s2, 512, %s49, [#allocation6], 64, 64, 4
    $region13: #{tpu_custom_call.1} parent=1 // pred_fallthru
      _
    // Predicated region
    $region14: #{tpu_custom_call.1} parent=1 // pred_check
      _
    $region15: #{tpu_custom_call.1} parent=1 // pred_check_branch
      %56 = sbr.rel (0) target = $region17
    $region16: #{tpu_custom_call.1} parent=1 // pred_region
      _
    $region17: #{tpu_custom_call.1} parent=1 // pred_fallthru
      _
    // Predicated region
    $region18: #{tpu_custom_call.1} parent=1 // pred_check
      _
    $region19: #{tpu_custom_call.1} parent=1 // pred_check_branch
      %58 = sbr.rel (0) target = $region21
    $region20: #{tpu_custom_call.1} parent=1 // pred_region
      _
    $region21: #{tpu_custom_call.1} parent=1 // pred_fallthru
      _
    // Predicated region
    $region22: #{tpu_custom_call.1} parent=1 // pred_check
      _
    $region23: #{tpu_custom_call.1} parent=1 // pred_check_branch
      %60 = sbr.rel (0) target = $region25
    $region24: #{tpu_custom_call.1} parent=1 // pred_region
      _
    $region25: #{tpu_custom_call.1} parent=1 // pred_fallthru
      _
    // Predicated region
    $region26: #{tpu_custom_call.1} parent=1 // pred_check
      _
    $region27: #{tpu_custom_call.1} parent=1 // pred_check_branch
      %62 = sbr.rel (0) target = $region29
    $region28: #{tpu_custom_call.1} parent=1 // pred_region
      %s64 = ssub.s32 128, 128
      %65 = vsyncadd [#allocation9], %s64
      %s67 = sshll.u32 [#allocation8], 4
      %s68 = int_to_ptr.vmem [resolvable:$true] %s67
      %70 = dma.hbm_to_vmem [thread:$0]  %s6, 128, %s68, [#allocation9]
    $region29: #{tpu_custom_call.1} parent=1 // pred_fallthru
      _
    // Predicated region
    $region30: #{tpu_custom_call.1} parent=1 // pred_check
      _
    $region31: #{tpu_custom_call.1} parent=1 // pred_check_branch
      %72 = sbr.rel (0) target = $region33
    $region32: #{tpu_custom_call.1} parent=1 // pred_region
      _
    $region33: #{tpu_custom_call.1} parent=1 // pred_fallthru
      _
    // Predicated region
    $region34: #{tpu_custom_call.1} parent=1 // pred_check
      _
    $region35: #{tpu_custom_call.1} parent=1 // pred_check_branch
      %74 = sbr.rel (0) target = $region37
    $region36: #{tpu_custom_call.1} parent=1 // pred_region
      %s76 = ssub.s32 64, 64
      %77 = vsyncadd [#allocation9], %s76
      %s79 = sshll.u32 [#allocation10], 4
      %s80 = int_to_ptr.vmem [resolvable:$true] %s79
      %82 = dma.hbm_to_vmem [thread:$0]  %s8, 64, %s80, [#allocation9]
    $region37: #{tpu_custom_call.1} parent=1 // pred_fallthru
      _
    // Predicated region
    $region38: #{tpu_custom_call.1} parent=1 // pred_check
      _
    $region39: #{tpu_custom_call.1} parent=1 // pred_check_branch
      %84 = sbr.rel (0) target = $region41
    $region40: #{tpu_custom_call.1} parent=1 // pred_region
      %s86 = ssub.s32 16, 16
      %87 = vsyncadd [#allocation4], %s86
      %s89 = sshll.u32 %s9, 4
      %s90 = int_to_ptr.vmem [resolvable:$true] %s89
      %92 = dma.vmem_to_smem %s90, 16, [#allocation11], [#allocation4]
    $region41: #{tpu_custom_call.1} parent=1 // pred_fallthru
      _
    // Predicated region
    $region42: #{tpu_custom_call.1} parent=1 // pred_check
      _
    $region43: #{tpu_custom_call.1} parent=1 // pred_check_branch
      %94 = sbr.rel (0) target = $region45
    $region44: #{tpu_custom_call.1} parent=1 // pred_region
      %95 = dma.done [#allocation3], 512
    $region45: #{tpu_custom_call.1} parent=1 // pred_fallthru
      _
    // Predicated region
    $region46: #{tpu_custom_call.1} parent=1 // pred_check
      _
    $region47: #{tpu_custom_call.1} parent=1 // pred_check_branch
      %97 = sbr.rel (0) target = $region49
    $region48: #{tpu_custom_call.1} parent=1 // pred_region
      %98 = dma.done [#allocation6], 512
    $region49: #{tpu_custom_call.1} parent=1 // pred_fallthru
      _
    // Predicated region
    $region50: #{tpu_custom_call.1} parent=1 // pred_check
      _
    $region51: #{tpu_custom_call.1} parent=1 // pred_check_branch
      %100 = sbr.rel (0) target = $region53
    $region52: #{tpu_custom_call.1} parent=1 // pred_region
      %101 = dma.done [#allocation6], 512
    $region53: #{tpu_custom_call.1} parent=1 // pred_fallthru
      _
    // Predicated region
    $region54: #{tpu_custom_call.1} parent=1 // pred_check
      _
    $region55: #{tpu_custom_call.1} parent=1 // pred_check_branch
      %103 = sbr.rel (0) target = $region57
    $region56: #{tpu_custom_call.1} parent=1 // pred_region
      %104 = dma.done [#allocation9], 128
    $region57: #{tpu_custom_call.1} parent=1 // pred_fallthru
      _
    // Predicated region
    $region58: #{tpu_custom_call.1} parent=1 // pred_check
      _
    $region59: #{tpu_custom_call.1} parent=1 // pred_check_branch
      %106 = sbr.rel (0) target = $region61
    $region60: #{tpu_custom_call.1} parent=1 // pred_region
      %107 = dma.done [#allocation9], 64
    $region61: #{tpu_custom_call.1} parent=1 // pred_fallthru
      _
    // Predicated region
    $region62: #{tpu_custom_call.1} parent=1 // pred_check
      _
    $region63: #{tpu_custom_call.1} parent=1 // pred_check_branch
      %109 = sbr.rel (0) target = $region65
    $region64: #{tpu_custom_call.1} parent=1 // pred_region
      %110 = dma.done [#allocation4], 16
    $region65: #{tpu_custom_call.1} parent=1 // pred_fallthru
      _
    %111 = sfence
    %v112 = vld [vmem:[%s7] sm:$0xf]
    %s113 = sld [smem:[#allocation11]]
    %s114 = sld [smem:[#allocation11 + $0x1]]
    %s115 = sld [smem:[#allocation11 + $0x2]]
    %s116 = sld [smem:[#allocation11 + $0x3]]
    %v117 = vld [vmem:[#allocation2] sm:$0xf]
    %v118 = vld [vmem:[#allocation2 + $0x4] sm:$0xf]
    %v119 = vld [vmem:[#allocation2 + $0x8] sm:$0xf]
    %v120 = vld [vmem:[#allocation2 + $0xc] sm:$0xf]
    %v121 = vld [vmem:[#allocation2 + $0x10] sm:$0xf]
    %v122 = vld [vmem:[#allocation2 + $0x14] sm:$0xf]
    %v123 = vld [vmem:[#allocation2 + $0x18] sm:$0xf]
    %v124 = vld [vmem:[#allocation2 + $0x1c] sm:$0xf]
    %v125 = vunpack.c.l.bf16 %v117
    %v126 = vunpack.c.l.bf16 %v118
    %v127 = vunpack.c.l.bf16 %v119
    %v128 = vunpack.c.l.bf16 %v120
    %v129 = vunpack.c.l.bf16 %v121
    %v130 = vunpack.c.l.bf16 %v122
    %v131 = vunpack.c.l.bf16 %v123
    %v132 = vunpack.c.l.bf16 %v124
    %v133 = vld [vmem:[#allocation7] sm:$0xf]
    %v134 = vld [vmem:[#allocation7 + $0x4] sm:$0xf]
    %v135 = vld [vmem:[#allocation7 + $0x8] sm:$0xf]
    %v136 = vld [vmem:[#allocation7 + $0xc] sm:$0xf]
    %v137 = vld [vmem:[#allocation7 + $0x10] sm:$0xf]
    %v138 = vld [vmem:[#allocation7 + $0x14] sm:$0xf]
    %v139 = vld [vmem:[#allocation7 + $0x18] sm:$0xf]
    %v140 = vld [vmem:[#allocation7 + $0x1c] sm:$0xf]
    %v141 = vunpack.c.l.bf16 %v133
    %v142 = vunpack.c.l.bf16 %v134
    %v143 = vunpack.c.l.bf16 %v135
    %v144 = vunpack.c.l.bf16 %v136
    %v145 = vunpack.c.l.bf16 %v137
    %v146 = vunpack.c.l.bf16 %v138
    %v147 = vunpack.c.l.bf16 %v139
    %v148 = vunpack.c.l.bf16 %v140
    %v149 = vld [vmem:[%s3] sm:$0xff]
    %v150 = vmul.f32 %v141, %v125
    %v151 = vmul.f32 %v142, %v126
    %v152 = vmul.f32 %v143, %v127
    %v153 = vmul.f32 %v144, %v128
    %v154 = vmul.f32 %v145, %v129
    %v155 = vmul.f32 %v146, %v130
    %v156 = vmul.f32 %v147, %v131
    %v157 = vmul.f32 %v148, %v132
    %vm158 = vcmask 261120
    %v159 = vsel %vm158, %v150, 0.0
    %v160 = vrot.slane %v159, 4
    %v161 = vadd.f32 %v159, %v160
    %v162 = vrot.slane %v161, 2
    %v163 = vadd.f32 %v161, %v162
    %v164 = vrot.slane %v163, 1
    %v165 = vadd.f32 %v163, %v164
    %v166 = vsel %vm158, %v151, 0.0
    %v167 = vrot.slane %v166, 4
    %v168 = vadd.f32 %v166, %v167
    %v169 = vrot.slane %v168, 2
    %v170 = vadd.f32 %v168, %v169
    %v171 = vrot.slane %v170, 1
    %v172 = vadd.f32 %v170, %v171
    %v173 = vsel %vm158, %v152, 0.0
    %v174 = vrot.slane %v173, 4
    %v175 = vadd.f32 %v173, %v174
    %v176 = vrot.slane %v175, 2
    %v177 = vadd.f32 %v175, %v176
    %v178 = vrot.slane %v177, 1
    %v179 = vadd.f32 %v177, %v178
    %v180 = vsel %vm158, %v153, 0.0
    %v181 = vrot.slane %v180, 4
    %v182 = vadd.f32 %v180, %v181
    %v183 = vrot.slane %v182, 2
    %v184 = vadd.f32 %v182, %v183
    %v185 = vrot.slane %v184, 1
    %v186 = vadd.f32 %v184, %v185
    %v187 = vsel %vm158, %v154, 0.0
    %v188 = vrot.slane %v187, 4
    %v189 = vadd.f32 %v187, %v188
    %v190 = vrot.slane %v189, 2
    %v191 = vadd.f32 %v189, %v190
    %v192 = vrot.slane %v191, 1
    %v193 = vadd.f32 %v191, %v192
    %v194 = vsel %vm158, %v155, 0.0
    %v195 = vrot.slane %v194, 4
    %v196 = vadd.f32 %v194, %v195
    %v197 = vrot.slane %v196, 2
    %v198 = vadd.f32 %v196, %v197
    %v199 = vrot.slane %v198, 1
    %v200 = vadd.f32 %v198, %v199
    %v201 = vsel %vm158, %v156, 0.0
    %v202 = vrot.slane %v201, 4
    %v203 = vadd.f32 %v201, %v202
    %v204 = vrot.slane %v203, 2
    %v205 = vadd.f32 %v203, %v204
    %v206 = vrot.slane %v205, 1
    %v207 = vadd.f32 %v205, %v206
    %v208 = vsel %vm158, %v157, 0.0
    %v209 = vrot.slane %v208, 4
    %v210 = vadd.f32 %v208, %v209
    %v211 = vrot.slane %v210, 2
    %v212 = vadd.f32 %v210, %v211
    %v213 = vrot.slane %v212, 1
    %v214 = vadd.f32 %v212, %v213
    %v215 = vlaneseq
    %v216 = vshrl.u32 %v215, 7
    %v217 = vsub.s32 0, %v216
    %v218 = vrot.slane %v112, %v217
    %v219 = vmul.f32 %v125, %v218
    %v220 = vmul.f32 %v126, %v218
    %v221 = vmul.f32 %v127, %v218
    %v222 = vmul.f32 %v128, %v218
    %v223 = vmul.f32 %v129, %v218
    %v224 = vmul.f32 %v130, %v218
    %v225 = vmul.f32 %v131, %v218
    %v226 = vmul.f32 %v132, %v218
    %v227 = vsel %vm158, %v219, 0.0
    %228 = vadd.xlane.f32.xlu0 %v227
    %v229 = vpop.xlane.xlu0 %228
    %v230 = vsel %vm158, %v220, 0.0
    %231 = vadd.xlane.f32.xlu0 %v230
    %v232 = vpop.xlane.xlu0 %231
    %v233 = vsel %vm158, %v221, 0.0
    %234 = vadd.xlane.f32.xlu0 %v233
    %v235 = vpop.xlane.xlu0 %234
    %v236 = vsel %vm158, %v222, 0.0
    %237 = vadd.xlane.f32.xlu0 %v236
    %v238 = vpop.xlane.xlu0 %237
    %v239 = vsel %vm158, %v223, 0.0
    %240 = vadd.xlane.f32.xlu0 %v239
    %v241 = vpop.xlane.xlu0 %240
    %v242 = vsel %vm158, %v224, 0.0
    %243 = vadd.xlane.f32.xlu0 %v242
    %v244 = vpop.xlane.xlu0 %243
    %v245 = vsel %vm158, %v225, 0.0
    %246 = vadd.xlane.f32.xlu0 %v245
    %v247 = vpop.xlane.xlu0 %246
    %v248 = vsel %vm158, %v226, 0.0
    %249 = vadd.xlane.f32.xlu0 %v248
    %v250 = vpop.xlane.xlu0 %249
    %v251 = vstv %s113
    %v252 = vadd.f32 %v229, %v251
    %v253 = vadd.f32 %v232, %v251
    %v254 = vadd.f32 %v235, %v251
    %v255 = vadd.f32 %v238, %v251
    %v256 = vadd.f32 %v241, %v251
    %v257 = vadd.f32 %v244, %v251
    %v258 = vadd.f32 %v247, %v251
    %v259 = vadd.f32 %v250, %v251
    %vm260 = vcmp.gt.f32.partialorder %v149, 0.5
    %v269 = vlaneseq
    %v270 = vand.u32 %v269, 127
    %v271 = vlaneseq
    %v272 = vshrl.u32 %v271, 7
    %v273 = vsub.s32 %v270, %v272
    %v274 = vrot.slane %v252, %v273
    %v275 = vlaneseq
    %v276 = vshrl.u32 %v275, 7
    %v277 = vsub.s32 %v270, %v276
    %v278 = vrot.slane %v253, %v277
    %v279 = vlaneseq
    %v280 = vshrl.u32 %v279, 7
    %v281 = vsub.s32 %v270, %v280
    %v282 = vrot.slane %v254, %v281
    %v283 = vlaneseq
    %v284 = vshrl.u32 %v283, 7
    %v285 = vsub.s32 %v270, %v284
    %v286 = vrot.slane %v255, %v285
    %v287 = vlaneseq
    %v288 = vshrl.u32 %v287, 7
    %v289 = vsub.s32 %v270, %v288
    %v290 = vrot.slane %v256, %v289
    %v291 = vlaneseq
    %v292 = vshrl.u32 %v291, 7
    %v293 = vsub.s32 %v270, %v292
    %v294 = vrot.slane %v257, %v293
    %v295 = vlaneseq
    %v296 = vshrl.u32 %v295, 7
    %v297 = vsub.s32 %v270, %v296
    %v298 = vrot.slane %v258, %v297
    %v299 = vlaneseq
    %v300 = vshrl.u32 %v299, 7
    %v301 = vsub.s32 %v270, %v300
    %v302 = vrot.slane %v259, %v301
    %vm303 = vcmask 1041409
    %v304 = vsel %vm303, %v278, %v274
    %vm305 = vcmask 1042434
    %v306 = vsel %vm305, %v282, %v304
    %vm307 = vcmask 1043459
    %v308 = vsel %vm307, %v286, %v306
    %vm309 = vcmask 1044484
    %v310 = vsel %vm309, %v290, %v308
    %vm311 = vcmask 1045509
    %v312 = vsel %vm311, %v294, %v310
    %vm313 = vcmask 1046534
    %v314 = vsel %vm313, %v298, %v312
    %vm315 = vcmask 1047559
    %v316 = vsel %vm315, %v302, %v314
    %v318 = vsel %vm260, -inf, %v316
    %vm319 = vcmask 64512
    %v320 = vsel %vm319, %v318, -inf
    %321 = vmax.xlane.f32.xlu0 %v320
    %v322 = vpop.xlane.xlu0 %321
    %v323 = vsub.f32 %v318, %v322
    %v324 = vmul.f32 %v323, 1.442695
    %v325 = vpow.pop %v324
    %v326 = vsel %vm319, %v325, 0.0
    %327 = vadd.xlane.f32.xlu0 %v326
    %v328 = vpop.xlane.xlu0 %327
    %v329 = vlaneseq
    %v330 = vshrl.u32 %v329, 7
    %v331 = vsub.s32 0, %v330
    %v332 = vrot.slane %v325, %v331
    %334 = vbcast.lane.b32.xlu0 %v332, 256
    %v335 = vpop.permute.xlu0 %334
    %v336 = vlaneseq
    %v337 = vshrl.u32 %v336, 7
    %v338 = vsub.s32 1, %v337
    %v339 = vrot.slane %v325, %v338
    %341 = vbcast.lane.b32.xlu0 %v339, 256
    %v342 = vpop.permute.xlu0 %341
    %v343 = vlaneseq
    %v344 = vshrl.u32 %v343, 7
    %v345 = vsub.s32 2, %v344
    %v346 = vrot.slane %v325, %v345
    %348 = vbcast.lane.b32.xlu0 %v346, 256
    %v349 = vpop.permute.xlu0 %348
    %v350 = vlaneseq
    %v351 = vshrl.u32 %v350, 7
    %v352 = vsub.s32 3, %v351
    %v353 = vrot.slane %v325, %v352
    %355 = vbcast.lane.b32.xlu0 %v353, 256
    %v356 = vpop.permute.xlu0 %355
    %v357 = vlaneseq
    %v358 = vshrl.u32 %v357, 7
    %v359 = vsub.s32 4, %v358
    %v360 = vrot.slane %v325, %v359
    %362 = vbcast.lane.b32.xlu0 %v360, 256
    %v363 = vpop.permute.xlu0 %362
    %v364 = vlaneseq
    %v365 = vshrl.u32 %v364, 7
    %v366 = vsub.s32 5, %v365
    %v367 = vrot.slane %v325, %v366
    %369 = vbcast.lane.b32.xlu0 %v367, 256
    %v370 = vpop.permute.xlu0 %369
    %v371 = vlaneseq
    %v372 = vshrl.u32 %v371, 7
    %v373 = vsub.s32 6, %v372
    %v374 = vrot.slane %v325, %v373
    %376 = vbcast.lane.b32.xlu0 %v374, 256
    %v377 = vpop.permute.xlu0 %376
    %v378 = vlaneseq
    %v379 = vshrl.u32 %v378, 7
    %v380 = vsub.s32 7, %v379
    %v381 = vrot.slane %v325, %v380
    %383 = vbcast.lane.b32.xlu0 %v381, 256
    %v384 = vpop.permute.xlu0 %383
    %v385 = vmul.f32 %v335, %v125
    %v386 = vmul.f32 %v342, %v126
    %v387 = vmul.f32 %v349, %v127
    %v388 = vmul.f32 %v356, %v128
    %v389 = vmul.f32 %v363, %v129
    %v390 = vmul.f32 %v370, %v130
    %v391 = vmul.f32 %v377, %v131
    %v392 = vmul.f32 %v384, %v132
    %v393 = vsel %vm158, %v385, 0.0
    %v394 = vrot.slane %v393, 4
    %v395 = vadd.f32 %v393, %v394
    %v396 = vrot.slane %v395, 2
    %v397 = vadd.f32 %v395, %v396
    %v398 = vrot.slane %v397, 1
    %v399 = vadd.f32 %v397, %v398
    %v400 = vsel %vm158, %v386, 0.0
    %v401 = vrot.slane %v400, 4
    %v402 = vadd.f32 %v400, %v401
    %v403 = vrot.slane %v402, 2
    %v404 = vadd.f32 %v402, %v403
    %v405 = vrot.slane %v404, 1
    %v406 = vadd.f32 %v404, %v405
    %v407 = vsel %vm158, %v387, 0.0
    %v408 = vrot.slane %v407, 4
    %v409 = vadd.f32 %v407, %v408
    %v410 = vrot.slane %v409, 2
    %v411 = vadd.f32 %v409, %v410
    %v412 = vrot.slane %v411, 1
    %v413 = vadd.f32 %v411, %v412
    %v414 = vsel %vm158, %v388, 0.0
    %v415 = vrot.slane %v414, 4
    %v416 = vadd.f32 %v414, %v415
    %v417 = vrot.slane %v416, 2
    %v418 = vadd.f32 %v416, %v417
    %v419 = vrot.slane %v418, 1
    %v420 = vadd.f32 %v418, %v419
    %v421 = vsel %vm158, %v389, 0.0
    %v422 = vrot.slane %v421, 4
    %v423 = vadd.f32 %v421, %v422
    %v424 = vrot.slane %v423, 2
    %v425 = vadd.f32 %v423, %v424
    %v426 = vrot.slane %v425, 1
    %v427 = vadd.f32 %v425, %v426
    %v428 = vsel %vm158, %v390, 0.0
    %v429 = vrot.slane %v428, 4
    %v430 = vadd.f32 %v428, %v429
    %v431 = vrot.slane %v430, 2
    %v432 = vadd.f32 %v430, %v431
    %v433 = vrot.slane %v432, 1
    %v434 = vadd.f32 %v432, %v433
    %v435 = vsel %vm158, %v391, 0.0
    %v436 = vrot.slane %v435, 4
    %v437 = vadd.f32 %v435, %v436
    %v438 = vrot.slane %v437, 2
    %v439 = vadd.f32 %v437, %v438
    %v440 = vrot.slane %v439, 1
    %v441 = vadd.f32 %v439, %v440
    %v442 = vsel %vm158, %v392, 0.0
    %v443 = vrot.slane %v442, 4
    %v444 = vadd.f32 %v442, %v443
    %v445 = vrot.slane %v444, 2
    %v446 = vadd.f32 %v444, %v445
    %v447 = vrot.slane %v446, 1
    %v448 = vadd.f32 %v446, %v447
    %v449 = vld [vmem:[#allocation5] sm:$0xf]
    %v450 = vld [vmem:[#allocation5 + $0x4] sm:$0xf]
    %v451 = vld [vmem:[#allocation5 + $0x8] sm:$0xf]
    %v452 = vld [vmem:[#allocation5 + $0xc] sm:$0xf]
    %v453 = vld [vmem:[#allocation5 + $0x10] sm:$0xf]
    %v454 = vld [vmem:[#allocation5 + $0x14] sm:$0xf]
    %v455 = vld [vmem:[#allocation5 + $0x18] sm:$0xf]
    %v456 = vld [vmem:[#allocation5 + $0x1c] sm:$0xf]
    %v457 = vunpack.c.l.bf16 %v449
    %v458 = vunpack.c.l.bf16 %v450
    %v459 = vunpack.c.l.bf16 %v451
    %v460 = vunpack.c.l.bf16 %v452
    %v461 = vunpack.c.l.bf16 %v453
    %v462 = vunpack.c.l.bf16 %v454
    %v463 = vunpack.c.l.bf16 %v455
    %v464 = vunpack.c.l.bf16 %v456
    %v465 = vmul.f32 %v399, %v457
    %v466 = vmul.f32 %v406, %v458
    %v467 = vmul.f32 %v413, %v459
    %v468 = vmul.f32 %v420, %v460
    %v469 = vmul.f32 %v427, %v461
    %v470 = vmul.f32 %v434, %v462
    %v471 = vmul.f32 %v441, %v463
    %v472 = vmul.f32 %v448, %v464
    %v473 = vsel %vm158, %v465, 0.0
    %474 = vadd.xlane.f32.xlu0 %v473
    %v475 = vpop.xlane.xlu0 %474
    %v476 = vsel %vm158, %v466, 0.0
    %477 = vadd.xlane.f32.xlu0 %v476
    %v478 = vpop.xlane.xlu0 %477
    %v479 = vsel %vm158, %v467, 0.0
    %480 = vadd.xlane.f32.xlu0 %v479
    %v481 = vpop.xlane.xlu0 %480
    %v482 = vsel %vm158, %v468, 0.0
    %483 = vadd.xlane.f32.xlu0 %v482
    %v484 = vpop.xlane.xlu0 %483
    %v485 = vsel %vm158, %v469, 0.0
    %486 = vadd.xlane.f32.xlu0 %v485
    %v487 = vpop.xlane.xlu0 %486
    %v488 = vsel %vm158, %v470, 0.0
    %489 = vadd.xlane.f32.xlu0 %v488
    %v490 = vpop.xlane.xlu0 %489
    %v491 = vsel %vm158, %v471, 0.0
    %492 = vadd.xlane.f32.xlu0 %v491
    %v493 = vpop.xlane.xlu0 %492
    %v494 = vsel %vm158, %v472, 0.0
    %495 = vadd.xlane.f32.xlu0 %v494
    %v496 = vpop.xlane.xlu0 %495
    %v497 = vrcp.pop %v328
    %v498 = vmul.f32 0.17677669, %v497
    %v500 = vlaneseq
    %v501 = vshrl.u32 %v500, 7
    %v502 = vsub.s32 0, %v501
    %v503 = vrot.slane %v498, %v502
    %v504 = vlaneseq
    %v505 = vshrl.u32 %v504, 7
    %v506 = vsub.s32 1, %v505
    %v507 = vrot.slane %v498, %v506
    %v508 = vlaneseq
    %v509 = vshrl.u32 %v508, 7
    %v510 = vsub.s32 2, %v509
    %v511 = vrot.slane %v498, %v510
    %v512 = vlaneseq
    %v513 = vshrl.u32 %v512, 7
    %v514 = vsub.s32 3, %v513
    %v515 = vrot.slane %v498, %v514
    %v516 = vlaneseq
    %v517 = vshrl.u32 %v516, 7
    %v518 = vsub.s32 4, %v517
    %v519 = vrot.slane %v498, %v518
    %v520 = vlaneseq
    %v521 = vshrl.u32 %v520, 7
    %v522 = vsub.s32 5, %v521
    %v523 = vrot.slane %v498, %v522
    %v524 = vlaneseq
    %v525 = vshrl.u32 %v524, 7
    %v526 = vsub.s32 6, %v525
    %v527 = vrot.slane %v498, %v526
    %v528 = vlaneseq
    %v529 = vshrl.u32 %v528, 7
    %v530 = vsub.s32 7, %v529
    %v531 = vrot.slane %v498, %v530
    %v540 = vmul.f32 %v475, %v503
    %v541 = vmul.f32 %v478, %v507
    %v542 = vmul.f32 %v481, %v511
    %v543 = vmul.f32 %v484, %v515
    %v544 = vmul.f32 %v487, %v519
    %v545 = vmul.f32 %v490, %v523
    %v546 = vmul.f32 %v493, %v527
    %v547 = vmul.f32 %v496, %v531
    %v548 = vmax.f32 %v125, 0.0
    %v549 = vmax.f32 %v126, 0.0
    %v550 = vmax.f32 %v127, 0.0
    %v551 = vmax.f32 %v128, 0.0
    %v552 = vmax.f32 %v129, 0.0
    %v553 = vmax.f32 %v130, 0.0
    %v554 = vmax.f32 %v131, 0.0
    %v555 = vmax.f32 %v132, 0.0
    %v556 = vsel %vm158, %v548, 0.0
    %557 = vadd.xlane.f32.xlu0 %v556
    %v558 = vpop.xlane.xlu0 %557
    %v559 = vsel %vm158, %v549, 0.0
    %560 = vadd.xlane.f32.xlu0 %v559
    %v561 = vpop.xlane.xlu0 %560
    %v562 = vsel %vm158, %v550, 0.0
    %563 = vadd.xlane.f32.xlu0 %v562
    %v564 = vpop.xlane.xlu0 %563
    %v565 = vsel %vm158, %v551, 0.0
    %566 = vadd.xlane.f32.xlu0 %v565
    %v567 = vpop.xlane.xlu0 %566
    %v568 = vsel %vm158, %v552, 0.0
    %569 = vadd.xlane.f32.xlu0 %v568
    %v570 = vpop.xlane.xlu0 %569
    %v571 = vsel %vm158, %v553, 0.0
    %572 = vadd.xlane.f32.xlu0 %v571
    %v573 = vpop.xlane.xlu0 %572
    %v574 = vsel %vm158, %v554, 0.0
    %575 = vadd.xlane.f32.xlu0 %v574
    %v576 = vpop.xlane.xlu0 %575
    %v577 = vsel %vm158, %v555, 0.0
    %578 = vadd.xlane.f32.xlu0 %v577
    %v579 = vpop.xlane.xlu0 %578
    %v580 = vrcp.pop 32.0
    %v581 = vmul.f32 %v558, %v580
    %v582 = vmul.f32 %v561, %v580
    %v583 = vmul.f32 %v564, %v580
    %v584 = vmul.f32 %v567, %v580
    %v585 = vmul.f32 %v570, %v580
    %v586 = vmul.f32 %v573, %v580
    %v587 = vmul.f32 %v576, %v580
    %v588 = vmul.f32 %v579, %v580
    %v589 = vmul.f32 %v548, %v548
    %v590 = vmul.f32 %v549, %v549
    %v591 = vmul.f32 %v550, %v550
    %v592 = vmul.f32 %v551, %v551
    %v593 = vmul.f32 %v552, %v552
    %v594 = vmul.f32 %v553, %v553
    %v595 = vmul.f32 %v554, %v554
    %v596 = vmul.f32 %v555, %v555
    %v597 = vsel %vm158, %v589, 0.0
    %598 = vadd.xlane.f32.xlu0 %v597
    %v599 = vpop.xlane.xlu0 %598
    %v600 = vsel %vm158, %v590, 0.0
    %601 = vadd.xlane.f32.xlu0 %v600
    %v602 = vpop.xlane.xlu0 %601
    %v603 = vsel %vm158, %v591, 0.0
    %604 = vadd.xlane.f32.xlu0 %v603
    %v605 = vpop.xlane.xlu0 %604
    %v606 = vsel %vm158, %v592, 0.0
    %607 = vadd.xlane.f32.xlu0 %v606
    %v608 = vpop.xlane.xlu0 %607
    %v609 = vsel %vm158, %v593, 0.0
    %610 = vadd.xlane.f32.xlu0 %v609
    %v611 = vpop.xlane.xlu0 %610
    %v612 = vsel %vm158, %v594, 0.0
    %613 = vadd.xlane.f32.xlu0 %v612
    %v614 = vpop.xlane.xlu0 %613
    %v615 = vsel %vm158, %v595, 0.0
    %616 = vadd.xlane.f32.xlu0 %v615
    %v617 = vpop.xlane.xlu0 %616
    %v618 = vsel %vm158, %v596, 0.0
    %619 = vadd.xlane.f32.xlu0 %v618
    %v620 = vpop.xlane.xlu0 %619
    %v621 = vmul.f32 %v599, %v580
    %v622 = vmul.f32 %v602, %v580
    %v623 = vmul.f32 %v605, %v580
    %v624 = vmul.f32 %v608, %v580
    %v625 = vmul.f32 %v611, %v580
    %v626 = vmul.f32 %v614, %v580
    %v627 = vmul.f32 %v617, %v580
    %v628 = vmul.f32 %v620, %v580
    %v629 = vmul.f32 %v581, %v581
    %v630 = vmul.f32 %v582, %v582
    %v631 = vmul.f32 %v583, %v583
    %v632 = vmul.f32 %v584, %v584
    %v633 = vmul.f32 %v585, %v585
    %v634 = vmul.f32 %v586, %v586
    %v635 = vmul.f32 %v587, %v587
    %v636 = vmul.f32 %v588, %v588
    %v637 = vsub.f32 %v621, %v629
    %v638 = vsub.f32 %v622, %v630
    %v639 = vsub.f32 %v623, %v631
    %v640 = vsub.f32 %v624, %v632
    %v641 = vsub.f32 %v625, %v633
    %v642 = vsub.f32 %v626, %v634
    %v643 = vsub.f32 %v627, %v635
    %v644 = vsub.f32 %v628, %v636
    %v645 = vsub.f32 %v548, %v581
    %v646 = vsub.f32 %v549, %v582
    %v647 = vsub.f32 %v550, %v583
    %v648 = vsub.f32 %v551, %v584
    %v649 = vsub.f32 %v552, %v585
    %v650 = vsub.f32 %v553, %v586
    %v651 = vsub.f32 %v554, %v587
    %v652 = vsub.f32 %v555, %v588
    %v653 = vadd.f32 %v637, 1e-05
    %v654 = vadd.f32 %v638, 1e-05
    %v655 = vadd.f32 %v639, 1e-05
    %v656 = vadd.f32 %v640, 1e-05
    %v657 = vadd.f32 %v641, 1e-05
    %v658 = vadd.f32 %v642, 1e-05
    %v659 = vadd.f32 %v643, 1e-05
    %v660 = vadd.f32 %v644, 1e-05
    %v661 = vrsqrt.pop %v653
    %v662 = vrsqrt.pop %v654
    %v663 = vrsqrt.pop %v655
    %v664 = vrsqrt.pop %v656
    %v665 = vrsqrt.pop %v657
    %v666 = vrsqrt.pop %v658
    %v667 = vrsqrt.pop %v659
    %v668 = vrsqrt.pop %v660
    %v669 = vmul.f32 %v645, %v661
    %v670 = vmul.f32 %v646, %v662
    %v671 = vmul.f32 %v647, %v663
    %v672 = vmul.f32 %v648, %v664
    %v673 = vmul.f32 %v649, %v665
    %v674 = vmul.f32 %v650, %v666
    %v675 = vmul.f32 %v651, %v667
    %v676 = vmul.f32 %v652, %v668
    %v677 = vlaneseq
    %v678 = vshrl.u32 %v677, 7
    %v679 = vsub.s32 2, %v678
    %v680 = vrot.slane %v112, %v679
    %v681 = vmul.f32 %v669, %v680
    %v682 = vmul.f32 %v670, %v680
    %v683 = vmul.f32 %v671, %v680
    %v684 = vmul.f32 %v672, %v680
    %v685 = vmul.f32 %v673, %v680
    %v686 = vmul.f32 %v674, %v680
    %v687 = vmul.f32 %v675, %v680
    %v688 = vmul.f32 %v676, %v680
    %v689 = vlaneseq
    %v690 = vshrl.u32 %v689, 7
    %v691 = vsub.s32 3, %v690
    %v692 = vrot.slane %v112, %v691
    %v693 = vadd.f32 %v681, %v692
    %v694 = vadd.f32 %v682, %v692
    %v695 = vadd.f32 %v683, %v692
    %v696 = vadd.f32 %v684, %v692
    %v697 = vadd.f32 %v685, %v692
    %v698 = vadd.f32 %v686, %v692
    %v699 = vadd.f32 %v687, %v692
    %v700 = vadd.f32 %v688, %v692
    %v701 = vmax.f32 %v693, 0.0
    %v702 = vmax.f32 %v694, 0.0
    %v703 = vmax.f32 %v695, 0.0
    %v704 = vmax.f32 %v696, 0.0
    %v705 = vmax.f32 %v697, 0.0
    %v706 = vmax.f32 %v698, 0.0
    %v707 = vmax.f32 %v699, 0.0
    %v708 = vmax.f32 %v700, 0.0
    %v709 = vsel %vm158, %v701, 0.0
    %710 = vadd.xlane.f32.xlu0 %v709
    %v711 = vpop.xlane.xlu0 %710
    %v712 = vsel %vm158, %v702, 0.0
    %713 = vadd.xlane.f32.xlu0 %v712
    %v714 = vpop.xlane.xlu0 %713
    %v715 = vsel %vm158, %v703, 0.0
    %716 = vadd.xlane.f32.xlu0 %v715
    %v717 = vpop.xlane.xlu0 %716
    %v718 = vsel %vm158, %v704, 0.0
    %719 = vadd.xlane.f32.xlu0 %v718
    %v720 = vpop.xlane.xlu0 %719
    %v721 = vsel %vm158, %v705, 0.0
    %722 = vadd.xlane.f32.xlu0 %v721
    %v723 = vpop.xlane.xlu0 %722
    %v724 = vsel %vm158, %v706, 0.0
    %725 = vadd.xlane.f32.xlu0 %v724
    %v726 = vpop.xlane.xlu0 %725
    %v727 = vsel %vm158, %v707, 0.0
    %728 = vadd.xlane.f32.xlu0 %v727
    %v729 = vpop.xlane.xlu0 %728
    %v730 = vsel %vm158, %v708, 0.0
    %731 = vadd.xlane.f32.xlu0 %v730
    %v732 = vpop.xlane.xlu0 %731
    %v733 = vmul.f32 %v711, %v580
    %v734 = vmul.f32 %v714, %v580
    %v735 = vmul.f32 %v717, %v580
    %v736 = vmul.f32 %v720, %v580
    %v737 = vmul.f32 %v723, %v580
    %v738 = vmul.f32 %v726, %v580
    %v739 = vmul.f32 %v729, %v580
    %v740 = vmul.f32 %v732, %v580
    %v741 = vmul.f32 %v701, %v701
    %v742 = vmul.f32 %v702, %v702
    %v743 = vmul.f32 %v703, %v703
    %v744 = vmul.f32 %v704, %v704
    %v745 = vmul.f32 %v705, %v705
    %v746 = vmul.f32 %v706, %v706
    %v747 = vmul.f32 %v707, %v707
    %v748 = vmul.f32 %v708, %v708
    %v749 = vsel %vm158, %v741, 0.0
    %750 = vadd.xlane.f32.xlu0 %v749
    %v751 = vpop.xlane.xlu0 %750
    %v752 = vsel %vm158, %v742, 0.0
    %753 = vadd.xlane.f32.xlu0 %v752
    %v754 = vpop.xlane.xlu0 %753
    %v755 = vsel %vm158, %v743, 0.0
    %756 = vadd.xlane.f32.xlu0 %v755
    %v757 = vpop.xlane.xlu0 %756
    %v758 = vsel %vm158, %v744, 0.0
    %759 = vadd.xlane.f32.xlu0 %v758
    %v760 = vpop.xlane.xlu0 %759
    %v761 = vsel %vm158, %v745, 0.0
    %762 = vadd.xlane.f32.xlu0 %v761
    %v763 = vpop.xlane.xlu0 %762
    %v764 = vsel %vm158, %v746, 0.0
    %765 = vadd.xlane.f32.xlu0 %v764
    %v766 = vpop.xlane.xlu0 %765
    %v767 = vsel %vm158, %v747, 0.0
    %768 = vadd.xlane.f32.xlu0 %v767
    %v769 = vpop.xlane.xlu0 %768
    %v770 = vsel %vm158, %v748, 0.0
    %771 = vadd.xlane.f32.xlu0 %v770
    %v772 = vpop.xlane.xlu0 %771
    %v773 = vmul.f32 %v751, %v580
    %v774 = vmul.f32 %v754, %v580
    %v775 = vmul.f32 %v757, %v580
    %v776 = vmul.f32 %v760, %v580
    %v777 = vmul.f32 %v763, %v580
    %v778 = vmul.f32 %v766, %v580
    %v779 = vmul.f32 %v769, %v580
    %v780 = vmul.f32 %v772, %v580
    %v781 = vmul.f32 %v733, %v733
    %v782 = vmul.f32 %v734, %v734
    %v783 = vmul.f32 %v735, %v735
    %v784 = vmul.f32 %v736, %v736
    %v785 = vmul.f32 %v737, %v737
    %v786 = vmul.f32 %v738, %v738
    %v787 = vmul.f32 %v739, %v739
    %v788 = vmul.f32 %v740, %v740
    %v789 = vsub.f32 %v773, %v781
    %v790 = vsub.f32 %v774, %v782
    %v791 = vsub.f32 %v775, %v783
    %v792 = vsub.f32 %v776, %v784
    %v793 = vsub.f32 %v777, %v785
    %v794 = vsub.f32 %v778, %v786
    %v795 = vsub.f32 %v779, %v787
    %v796 = vsub.f32 %v780, %v788
    %v797 = vsub.f32 %v701, %v733
    %v798 = vsub.f32 %v702, %v734
    %v799 = vsub.f32 %v703, %v735
    %v800 = vsub.f32 %v704, %v736
    %v801 = vsub.f32 %v705, %v737
    %v802 = vsub.f32 %v706, %v738
    %v803 = vsub.f32 %v707, %v739
    %v804 = vsub.f32 %v708, %v740
    %v805 = vadd.f32 %v789, 1e-05
    %v806 = vadd.f32 %v790, 1e-05
    %v807 = vadd.f32 %v791, 1e-05
    %v808 = vadd.f32 %v792, 1e-05
    %v809 = vadd.f32 %v793, 1e-05
    %v810 = vadd.f32 %v794, 1e-05
    %v811 = vadd.f32 %v795, 1e-05
    %v812 = vadd.f32 %v796, 1e-05
    %v813 = vrsqrt.pop %v805
    %v814 = vrsqrt.pop %v806
    %v815 = vrsqrt.pop %v807
    %v816 = vrsqrt.pop %v808
    %v817 = vrsqrt.pop %v809
    %v818 = vrsqrt.pop %v810
    %v819 = vrsqrt.pop %v811
    %v820 = vrsqrt.pop %v812
    %v821 = vmul.f32 %v797, %v813
    %v822 = vmul.f32 %v798, %v814
    %v823 = vmul.f32 %v799, %v815
    %v824 = vmul.f32 %v800, %v816
    %v825 = vmul.f32 %v801, %v817
    %v826 = vmul.f32 %v802, %v818
    %v827 = vmul.f32 %v803, %v819
    %v828 = vmul.f32 %v804, %v820
    %v829 = vmul.f32 %v821, %v680
    %v830 = vmul.f32 %v822, %v680
    %v831 = vmul.f32 %v823, %v680
    %v832 = vmul.f32 %v824, %v680
    %v833 = vmul.f32 %v825, %v680
    %v834 = vmul.f32 %v826, %v680
    %v835 = vmul.f32 %v827, %v680
    %v836 = vmul.f32 %v828, %v680
    %v837 = vadd.f32 %v829, %v692
    %v838 = vadd.f32 %v830, %v692
    %v839 = vadd.f32 %v831, %v692
    %v840 = vadd.f32 %v832, %v692
    %v841 = vadd.f32 %v833, %v692
    %v842 = vadd.f32 %v834, %v692
    %v843 = vadd.f32 %v835, %v692
    %v844 = vadd.f32 %v836, %v692
    %v845 = vmax.f32 %v457, 0.0
    %v846 = vmax.f32 %v458, 0.0
    %v847 = vmax.f32 %v459, 0.0
    %v848 = vmax.f32 %v460, 0.0
    %v849 = vmax.f32 %v461, 0.0
    %v850 = vmax.f32 %v462, 0.0
    %v851 = vmax.f32 %v463, 0.0
    %v852 = vmax.f32 %v464, 0.0
    %v853 = vsel %vm158, %v845, 0.0
    %854 = vadd.xlane.f32.xlu0 %v853
    %v855 = vpop.xlane.xlu0 %854
    %v856 = vsel %vm158, %v846, 0.0
    %857 = vadd.xlane.f32.xlu0 %v856
    %v858 = vpop.xlane.xlu0 %857
    %v859 = vsel %vm158, %v847, 0.0
    %860 = vadd.xlane.f32.xlu0 %v859
    %v861 = vpop.xlane.xlu0 %860
    %v862 = vsel %vm158, %v848, 0.0
    %863 = vadd.xlane.f32.xlu0 %v862
    %v864 = vpop.xlane.xlu0 %863
    %v865 = vsel %vm158, %v849, 0.0
    %866 = vadd.xlane.f32.xlu0 %v865
    %v867 = vpop.xlane.xlu0 %866
    %v868 = vsel %vm158, %v850, 0.0
    %869 = vadd.xlane.f32.xlu0 %v868
    %v870 = vpop.xlane.xlu0 %869
    %v871 = vsel %vm158, %v851, 0.0
    %872 = vadd.xlane.f32.xlu0 %v871
    %v873 = vpop.xlane.xlu0 %872
    %v874 = vsel %vm158, %v852, 0.0
    %875 = vadd.xlane.f32.xlu0 %v874
    %v876 = vpop.xlane.xlu0 %875
    %v877 = vmul.f32 %v855, %v580
    %v878 = vmul.f32 %v858, %v580
    %v879 = vmul.f32 %v861, %v580
    %v880 = vmul.f32 %v864, %v580
    %v881 = vmul.f32 %v867, %v580
    %v882 = vmul.f32 %v870, %v580
    %v883 = vmul.f32 %v873, %v580
    %v884 = vmul.f32 %v876, %v580
    %v885 = vmul.f32 %v845, %v845
    %v886 = vmul.f32 %v846, %v846
    %v887 = vmul.f32 %v847, %v847
    %v888 = vmul.f32 %v848, %v848
    %v889 = vmul.f32 %v849, %v849
    %v890 = vmul.f32 %v850, %v850
    %v891 = vmul.f32 %v851, %v851
    %v892 = vmul.f32 %v852, %v852
    %v893 = vsel %vm158, %v885, 0.0
    %894 = vadd.xlane.f32.xlu0 %v893
    %v895 = vpop.xlane.xlu0 %894
    %v896 = vsel %vm158, %v886, 0.0
    %897 = vadd.xlane.f32.xlu0 %v896
    %v898 = vpop.xlane.xlu0 %897
    %v899 = vsel %vm158, %v887, 0.0
    %900 = vadd.xlane.f32.xlu0 %v899
    %v901 = vpop.xlane.xlu0 %900
    %v902 = vsel %vm158, %v888, 0.0
    %903 = vadd.xlane.f32.xlu0 %v902
    %v904 = vpop.xlane.xlu0 %903
    %v905 = vsel %vm158, %v889, 0.0
    %906 = vadd.xlane.f32.xlu0 %v905
    %v907 = vpop.xlane.xlu0 %906
    %v908 = vsel %vm158, %v890, 0.0
    %909 = vadd.xlane.f32.xlu0 %v908
    %v910 = vpop.xlane.xlu0 %909
    %v911 = vsel %vm158, %v891, 0.0
    %912 = vadd.xlane.f32.xlu0 %v911
    %v913 = vpop.xlane.xlu0 %912
    %v914 = vsel %vm158, %v892, 0.0
    %915 = vadd.xlane.f32.xlu0 %v914
    %v916 = vpop.xlane.xlu0 %915
    %v917 = vmul.f32 %v895, %v580
    %v918 = vmul.f32 %v898, %v580
    %v919 = vmul.f32 %v901, %v580
    %v920 = vmul.f32 %v904, %v580
    %v921 = vmul.f32 %v907, %v580
    %v922 = vmul.f32 %v910, %v580
    %v923 = vmul.f32 %v913, %v580
    %v924 = vmul.f32 %v916, %v580
    %v925 = vmul.f32 %v877, %v877
    %v926 = vmul.f32 %v878, %v878
    %v927 = vmul.f32 %v879, %v879
    %v928 = vmul.f32 %v880, %v880
    %v929 = vmul.f32 %v881, %v881
    %v930 = vmul.f32 %v882, %v882
    %v931 = vmul.f32 %v883, %v883
    %v932 = vmul.f32 %v884, %v884
    %v933 = vsub.f32 %v917, %v925
    %v934 = vsub.f32 %v918, %v926
    %v935 = vsub.f32 %v919, %v927
    %v936 = vsub.f32 %v920, %v928
    %v937 = vsub.f32 %v921, %v929
    %v938 = vsub.f32 %v922, %v930
    %v939 = vsub.f32 %v923, %v931
    %v940 = vsub.f32 %v924, %v932
    %v941 = vsub.f32 %v845, %v877
    %v942 = vsub.f32 %v846, %v878
    %v943 = vsub.f32 %v847, %v879
    %v944 = vsub.f32 %v848, %v880
    %v945 = vsub.f32 %v849, %v881
    %v946 = vsub.f32 %v850, %v882
    %v947 = vsub.f32 %v851, %v883
    %v948 = vsub.f32 %v852, %v884
    %v949 = vadd.f32 %v933, 1e-05
    %v950 = vadd.f32 %v934, 1e-05
    %v951 = vadd.f32 %v935, 1e-05
    %v952 = vadd.f32 %v936, 1e-05
    %v953 = vadd.f32 %v937, 1e-05
    %v954 = vadd.f32 %v938, 1e-05
    %v955 = vadd.f32 %v939, 1e-05
    %v956 = vadd.f32 %v940, 1e-05
    %v957 = vrsqrt.pop %v949
    %v958 = vrsqrt.pop %v950
    %v959 = vrsqrt.pop %v951
    %v960 = vrsqrt.pop %v952
    %v961 = vrsqrt.pop %v953
    %v962 = vrsqrt.pop %v954
    %v963 = vrsqrt.pop %v955
    %v964 = vrsqrt.pop %v956
    %v965 = vmul.f32 %v941, %v957
    %v966 = vmul.f32 %v942, %v958
    %v967 = vmul.f32 %v943, %v959
    %v968 = vmul.f32 %v944, %v960
    %v969 = vmul.f32 %v945, %v961
    %v970 = vmul.f32 %v946, %v962
    %v971 = vmul.f32 %v947, %v963
    %v972 = vmul.f32 %v948, %v964
    %v973 = vmul.f32 %v965, %v680
    %v974 = vmul.f32 %v966, %v680
    %v975 = vmul.f32 %v967, %v680
    %v976 = vmul.f32 %v968, %v680
    %v977 = vmul.f32 %v969, %v680
    %v978 = vmul.f32 %v970, %v680
    %v979 = vmul.f32 %v971, %v680
    %v980 = vmul.f32 %v972, %v680
    %v981 = vadd.f32 %v973, %v692
    %v982 = vadd.f32 %v974, %v692
    %v983 = vadd.f32 %v975, %v692
    %v984 = vadd.f32 %v976, %v692
    %v985 = vadd.f32 %v977, %v692
    %v986 = vadd.f32 %v978, %v692
    %v987 = vadd.f32 %v979, %v692
    %v988 = vadd.f32 %v980, %v692
    %v989 = vmax.f32 %v981, 0.0
    %v990 = vmax.f32 %v982, 0.0
    %v991 = vmax.f32 %v983, 0.0
    %v992 = vmax.f32 %v984, 0.0
    %v993 = vmax.f32 %v985, 0.0
    %v994 = vmax.f32 %v986, 0.0
    %v995 = vmax.f32 %v987, 0.0
    %v996 = vmax.f32 %v988, 0.0
    %v997 = vsel %vm158, %v989, 0.0
    %998 = vadd.xlane.f32.xlu0 %v997
    %v999 = vpop.xlane.xlu0 %998
    %v1000 = vsel %vm158, %v990, 0.0
    %1001 = vadd.xlane.f32.xlu0 %v1000
    %v1002 = vpop.xlane.xlu0 %1001
    %v1003 = vsel %vm158, %v991, 0.0
    %1004 = vadd.xlane.f32.xlu0 %v1003
    %v1005 = vpop.xlane.xlu0 %1004
    %v1006 = vsel %vm158, %v992, 0.0
    %1007 = vadd.xlane.f32.xlu0 %v1006
    %v1008 = vpop.xlane.xlu0 %1007
    %v1009 = vsel %vm158, %v993, 0.0
    %1010 = vadd.xlane.f32.xlu0 %v1009
    %v1011 = vpop.xlane.xlu0 %1010
    %v1012 = vsel %vm158, %v994, 0.0
    %1013 = vadd.xlane.f32.xlu0 %v1012
    %v1014 = vpop.xlane.xlu0 %1013
    %v1015 = vsel %vm158, %v995, 0.0
    %1016 = vadd.xlane.f32.xlu0 %v1015
    %v1017 = vpop.xlane.xlu0 %1016
    %v1018 = vsel %vm158, %v996, 0.0
    %1019 = vadd.xlane.f32.xlu0 %v1018
    %v1020 = vpop.xlane.xlu0 %1019
    %v1021 = vmul.f32 %v999, %v580
    %v1022 = vmul.f32 %v1002, %v580
    %v1023 = vmul.f32 %v1005, %v580
    %v1024 = vmul.f32 %v1008, %v580
    %v1025 = vmul.f32 %v1011, %v580
    %v1026 = vmul.f32 %v1014, %v580
    %v1027 = vmul.f32 %v1017, %v580
    %v1028 = vmul.f32 %v1020, %v580
    %v1029 = vmul.f32 %v989, %v989
    %v1030 = vmul.f32 %v990, %v990
    %v1031 = vmul.f32 %v991, %v991
    %v1032 = vmul.f32 %v992, %v992
    %v1033 = vmul.f32 %v993, %v993
    %v1034 = vmul.f32 %v994, %v994
    %v1035 = vmul.f32 %v995, %v995
    %v1036 = vmul.f32 %v996, %v996
    %v1037 = vsel %vm158, %v1029, 0.0
    %1038 = vadd.xlane.f32.xlu0 %v1037
    %v1039 = vpop.xlane.xlu0 %1038
    %v1040 = vsel %vm158, %v1030, 0.0
    %1041 = vadd.xlane.f32.xlu0 %v1040
    %v1042 = vpop.xlane.xlu0 %1041
    %v1043 = vsel %vm158, %v1031, 0.0
    %1044 = vadd.xlane.f32.xlu0 %v1043
    %v1045 = vpop.xlane.xlu0 %1044
    %v1046 = vsel %vm158, %v1032, 0.0
    %1047 = vadd.xlane.f32.xlu0 %v1046
    %v1048 = vpop.xlane.xlu0 %1047
    %v1049 = vsel %vm158, %v1033, 0.0
    %1050 = vadd.xlane.f32.xlu0 %v1049
    %v1051 = vpop.xlane.xlu0 %1050
    %v1052 = vsel %vm158, %v1034, 0.0
    %1053 = vadd.xlane.f32.xlu0 %v1052
    %v1054 = vpop.xlane.xlu0 %1053
    %v1055 = vsel %vm158, %v1035, 0.0
    %1056 = vadd.xlane.f32.xlu0 %v1055
    %v1057 = vpop.xlane.xlu0 %1056
    %v1058 = vsel %vm158, %v1036, 0.0
    %1059 = vadd.xlane.f32.xlu0 %v1058
    %v1060 = vpop.xlane.xlu0 %1059
    %v1061 = vmul.f32 %v1039, %v580
    %v1062 = vmul.f32 %v1042, %v580
    %v1063 = vmul.f32 %v1045, %v580
    %v1064 = vmul.f32 %v1048, %v580
    %v1065 = vmul.f32 %v1051, %v580
    %v1066 = vmul.f32 %v1054, %v580
    %v1067 = vmul.f32 %v1057, %v580
    %v1068 = vmul.f32 %v1060, %v580
    %v1069 = vmul.f32 %v1021, %v1021
    %v1070 = vmul.f32 %v1022, %v1022
    %v1071 = vmul.f32 %v1023, %v1023
    %v1072 = vmul.f32 %v1024, %v1024
    %v1073 = vmul.f32 %v1025, %v1025
    %v1074 = vmul.f32 %v1026, %v1026
    %v1075 = vmul.f32 %v1027, %v1027
    %v1076 = vmul.f32 %v1028, %v1028
    %v1077 = vsub.f32 %v1061, %v1069
    %v1078 = vsub.f32 %v1062, %v1070
    %v1079 = vsub.f32 %v1063, %v1071
    %v1080 = vsub.f32 %v1064, %v1072
    %v1081 = vsub.f32 %v1065, %v1073
    %v1082 = vsub.f32 %v1066, %v1074
    %v1083 = vsub.f32 %v1067, %v1075
    %v1084 = vsub.f32 %v1068, %v1076
    %v1085 = vsub.f32 %v989, %v1021
    %v1086 = vsub.f32 %v990, %v1022
    %v1087 = vsub.f32 %v991, %v1023
    %v1088 = vsub.f32 %v992, %v1024
    %v1089 = vsub.f32 %v993, %v1025
    %v1090 = vsub.f32 %v994, %v1026
    %v1091 = vsub.f32 %v995, %v1027
    %v1092 = vsub.f32 %v996, %v1028
    %v1093 = vadd.f32 %v1077, 1e-05
    %v1094 = vadd.f32 %v1078, 1e-05
    %v1095 = vadd.f32 %v1079, 1e-05
    %v1096 = vadd.f32 %v1080, 1e-05
    %v1097 = vadd.f32 %v1081, 1e-05
    %v1098 = vadd.f32 %v1082, 1e-05
    %v1099 = vadd.f32 %v1083, 1e-05
    %v1100 = vadd.f32 %v1084, 1e-05
    %v1101 = vrsqrt.pop %v1093
    %v1102 = vrsqrt.pop %v1094
    %v1103 = vrsqrt.pop %v1095
    %v1104 = vrsqrt.pop %v1096
    %v1105 = vrsqrt.pop %v1097
    %v1106 = vrsqrt.pop %v1098
    %v1107 = vrsqrt.pop %v1099
    %v1108 = vrsqrt.pop %v1100
    %v1109 = vmul.f32 %v1085, %v1101
    %v1110 = vmul.f32 %v1086, %v1102
    %v1111 = vmul.f32 %v1087, %v1103
    %v1112 = vmul.f32 %v1088, %v1104
    %v1113 = vmul.f32 %v1089, %v1105
    %v1114 = vmul.f32 %v1090, %v1106
    %v1115 = vmul.f32 %v1091, %v1107
    %v1116 = vmul.f32 %v1092, %v1108
    %v1117 = vmul.f32 %v1109, %v680
    %v1118 = vmul.f32 %v1110, %v680
    %v1119 = vmul.f32 %v1111, %v680
    %v1120 = vmul.f32 %v1112, %v680
    %v1121 = vmul.f32 %v1113, %v680
    %v1122 = vmul.f32 %v1114, %v680
    %v1123 = vmul.f32 %v1115, %v680
    %v1124 = vmul.f32 %v1116, %v680
    %v1125 = vadd.f32 %v1117, %v692
    %v1126 = vadd.f32 %v1118, %v692
    %v1127 = vadd.f32 %v1119, %v692
    %v1128 = vadd.f32 %v1120, %v692
    %v1129 = vadd.f32 %v1121, %v692
    %v1130 = vadd.f32 %v1122, %v692
    %v1131 = vadd.f32 %v1123, %v692
    %v1132 = vadd.f32 %v1124, %v692
    %v1133 = vlaneseq
    %v1134 = vshrl.u32 %v1133, 7
    %v1135 = vsub.s32 1, %v1134
    %v1136 = vrot.slane %v112, %v1135
    %v1137 = vmul.f32 %v837, %v1136
    %v1138 = vmul.f32 %v838, %v1136
    %v1139 = vmul.f32 %v839, %v1136
    %v1140 = vmul.f32 %v840, %v1136
    %v1141 = vmul.f32 %v841, %v1136
    %v1142 = vmul.f32 %v842, %v1136
    %v1143 = vmul.f32 %v843, %v1136
    %v1144 = vmul.f32 %v844, %v1136
    %v1145 = vsel %vm158, %v1137, 0.0
    %1146 = vadd.xlane.f32.xlu0 %v1145
    %v1147 = vpop.xlane.xlu0 %1146
    %v1148 = vsel %vm158, %v1138, 0.0
    %1149 = vadd.xlane.f32.xlu0 %v1148
    %v1150 = vpop.xlane.xlu0 %1149
    %v1151 = vsel %vm158, %v1139, 0.0
    %1152 = vadd.xlane.f32.xlu0 %v1151
    %v1153 = vpop.xlane.xlu0 %1152
    %v1154 = vsel %vm158, %v1140, 0.0
    %1155 = vadd.xlane.f32.xlu0 %v1154
    %v1156 = vpop.xlane.xlu0 %1155
    %v1157 = vsel %vm158, %v1141, 0.0
    %1158 = vadd.xlane.f32.xlu0 %v1157
    %v1159 = vpop.xlane.xlu0 %1158
    %v1160 = vsel %vm158, %v1142, 0.0
    %1161 = vadd.xlane.f32.xlu0 %v1160
    %v1162 = vpop.xlane.xlu0 %1161
    %v1163 = vsel %vm158, %v1143, 0.0
    %1164 = vadd.xlane.f32.xlu0 %v1163
    %v1165 = vpop.xlane.xlu0 %1164
    %v1166 = vsel %vm158, %v1144, 0.0
    %1167 = vadd.xlane.f32.xlu0 %v1166
    %v1168 = vpop.xlane.xlu0 %1167
    %v1169 = vstv %s114
    %v1170 = vadd.f32 %v1147, %v1169
    %v1171 = vadd.f32 %v1150, %v1169
    %v1172 = vadd.f32 %v1153, %v1169
    %v1173 = vadd.f32 %v1156, %v1169
    %v1174 = vadd.f32 %v1159, %v1169
    %v1175 = vadd.f32 %v1162, %v1169
    %v1176 = vadd.f32 %v1165, %v1169
    %v1177 = vadd.f32 %v1168, %v1169
    %v1178 = vmul.f32 %v165, %v1136
    %v1179 = vmul.f32 %v172, %v1136
    %v1180 = vmul.f32 %v179, %v1136
    %v1181 = vmul.f32 %v186, %v1136
    %v1182 = vmul.f32 %v193, %v1136
    %v1183 = vmul.f32 %v200, %v1136
    %v1184 = vmul.f32 %v207, %v1136
    %v1185 = vmul.f32 %v214, %v1136
    %v1194 = vrot.slane %v1179, 7
    %v1195 = vsel %vm303, %v1194, %v1178
    %v1196 = vrot.slane %v1180, 6
    %v1197 = vsel %vm305, %v1196, %v1195
    %v1198 = vrot.slane %v1181, 5
    %v1199 = vsel %vm307, %v1198, %v1197
    %v1200 = vrot.slane %v1182, 4
    %v1201 = vsel %vm309, %v1200, %v1199
    %v1202 = vrot.slane %v1183, 3
    %v1203 = vsel %vm311, %v1202, %v1201
    %v1204 = vrot.slane %v1184, 2
    %v1205 = vsel %vm313, %v1204, %v1203
    %v1206 = vrot.slane %v1185, 1
    %v1207 = vsel %vm315, %v1206, %v1205
    %v1209 = vsel %vm158, %v1207, 0.0
    %1210 = vadd.xlane.f32.xlu0 %v1209
    %v1211 = vpop.xlane.xlu0 %1210
    %v1212 = vadd.f32 %v1211, %v1169
    %v1213 = vld [vmem:[%s4] sm:$0xff]
    %vm1214 = vcmp.gt.f32.partialorder %v1213, 0.5
    %v1223 = vlaneseq
    %v1224 = vshrl.u32 %v1223, 7
    %v1225 = vsub.s32 %v270, %v1224
    %v1226 = vrot.slane %v1170, %v1225
    %v1227 = vlaneseq
    %v1228 = vshrl.u32 %v1227, 7
    %v1229 = vsub.s32 %v270, %v1228
    %v1230 = vrot.slane %v1171, %v1229
    %v1231 = vlaneseq
    %v1232 = vshrl.u32 %v1231, 7
    %v1233 = vsub.s32 %v270, %v1232
    %v1234 = vrot.slane %v1172, %v1233
    %v1235 = vlaneseq
    %v1236 = vshrl.u32 %v1235, 7
    %v1237 = vsub.s32 %v270, %v1236
    %v1238 = vrot.slane %v1173, %v1237
    %v1239 = vlaneseq
    %v1240 = vshrl.u32 %v1239, 7
    %v1241 = vsub.s32 %v270, %v1240
    %v1242 = vrot.slane %v1174, %v1241
    %v1243 = vlaneseq
    %v1244 = vshrl.u32 %v1243, 7
    %v1245 = vsub.s32 %v270, %v1244
    %v1246 = vrot.slane %v1175, %v1245
    %v1247 = vlaneseq
    %v1248 = vshrl.u32 %v1247, 7
    %v1249 = vsub.s32 %v270, %v1248
    %v1250 = vrot.slane %v1176, %v1249
    %v1251 = vlaneseq
    %v1252 = vshrl.u32 %v1251, 7
    %v1253 = vsub.s32 %v270, %v1252
    %v1254 = vrot.slane %v1177, %v1253
    %v1255 = vsel %vm303, %v1230, %v1226
    %v1256 = vsel %vm305, %v1234, %v1255
    %v1257 = vsel %vm307, %v1238, %v1256
    %v1258 = vsel %vm309, %v1242, %v1257
    %v1259 = vsel %vm311, %v1246, %v1258
    %v1260 = vsel %vm313, %v1250, %v1259
    %v1261 = vsel %vm315, %v1254, %v1260
    %v1263 = vsel %vm1214, -inf, %v1261
    %v1264 = vld [vmem:[%s5] sm:$0xff]
    %vm1265 = vcmp.gt.f32.partialorder %v1264, 0.5
    %v1266 = vsel %vm1265, -inf, %v1212
    %v1267 = vsel %vm319, %v1263, -inf
    %1268 = vmax.xlane.f32.xlu0 %v1267
    %v1269 = vpop.xlane.xlu0 %1268
    %v1270 = vmax.f32 %v1269, %v1266
    %1272 = vset.pattern.permute.xlu0 0
    %1273 = vperm.xlu0 %1272, %v1270
    %v1274 = vpop.permute.xlu0 %1273
    %v1276 = vsub.f32 %v1263, %v1274
    %v1277 = vmul.f32 %v1276, 1.442695
    %v1278 = vpow.pop %v1277
    %v1279 = vsub.f32 %v1266, %v1270
    %v1280 = vmul.f32 %v1279, 1.442695
    %v1281 = vpow.pop %v1280
    %v1282 = vsel %vm319, %v1278, 0.0
    %1283 = vadd.xlane.f32.xlu0 %v1282
    %v1284 = vpop.xlane.xlu0 %1283
    %v1285 = vadd.f32 %v1284, %v1281
    %v1286 = vlaneseq
    %v1287 = vshrl.u32 %v1286, 7
    %v1288 = vsub.s32 0, %v1287
    %v1289 = vrot.slane %v1278, %v1288
    %1291 = vbcast.lane.b32.xlu0 %v1289, 256
    %v1292 = vpop.permute.xlu0 %1291
    %v1293 = vlaneseq
    %v1294 = vshrl.u32 %v1293, 7
    %v1295 = vsub.s32 1, %v1294
    %v1296 = vrot.slane %v1278, %v1295
    %1298 = vbcast.lane.b32.xlu0 %v1296, 256
    %v1299 = vpop.permute.xlu0 %1298
    %v1300 = vlaneseq
    %v1301 = vshrl.u32 %v1300, 7
    %v1302 = vsub.s32 2, %v1301
    %v1303 = vrot.slane %v1278, %v1302
    %1305 = vbcast.lane.b32.xlu0 %v1303, 256
    %v1306 = vpop.permute.xlu0 %1305
    %v1307 = vlaneseq
    %v1308 = vshrl.u32 %v1307, 7
    %v1309 = vsub.s32 3, %v1308
    %v1310 = vrot.slane %v1278, %v1309
    %1312 = vbcast.lane.b32.xlu0 %v1310, 256
    %v1313 = vpop.permute.xlu0 %1312
    %v1314 = vlaneseq
    %v1315 = vshrl.u32 %v1314, 7
    %v1316 = vsub.s32 4, %v1315
    %v1317 = vrot.slane %v1278, %v1316
    %1319 = vbcast.lane.b32.xlu0 %v1317, 256
    %v1320 = vpop.permute.xlu0 %1319
    %v1321 = vlaneseq
    %v1322 = vshrl.u32 %v1321, 7
    %v1323 = vsub.s32 5, %v1322
    %v1324 = vrot.slane %v1278, %v1323
    %1326 = vbcast.lane.b32.xlu0 %v1324, 256
    %v1327 = vpop.permute.xlu0 %1326
    %v1328 = vlaneseq
    %v1329 = vshrl.u32 %v1328, 7
    %v1330 = vsub.s32 6, %v1329
    %v1331 = vrot.slane %v1278, %v1330
    %1333 = vbcast.lane.b32.xlu0 %v1331, 256
    %v1334 = vpop.permute.xlu0 %1333
    %v1335 = vlaneseq
    %v1336 = vshrl.u32 %v1335, 7
    %v1337 = vsub.s32 7, %v1336
    %v1338 = vrot.slane %v1278, %v1337
    %1340 = vbcast.lane.b32.xlu0 %v1338, 256
    %v1341 = vpop.permute.xlu0 %1340
    %v1342 = vmul.f32 %v1292, %v837
    %v1343 = vmul.f32 %v1299, %v838
    %v1344 = vmul.f32 %v1306, %v839
    %v1345 = vmul.f32 %v1313, %v840
    %v1346 = vmul.f32 %v1320, %v841
    %v1347 = vmul.f32 %v1327, %v842
    %v1348 = vmul.f32 %v1334, %v843
    %v1349 = vmul.f32 %v1341, %v844
    %v1350 = vsel %vm158, %v1342, 0.0
    %v1351 = vrot.slane %v1350, 4
    %v1352 = vadd.f32 %v1350, %v1351
    %v1353 = vrot.slane %v1352, 2
    %v1354 = vadd.f32 %v1352, %v1353
    %v1355 = vrot.slane %v1354, 1
    %v1356 = vadd.f32 %v1354, %v1355
    %v1357 = vsel %vm158, %v1343, 0.0
    %v1358 = vrot.slane %v1357, 4
    %v1359 = vadd.f32 %v1357, %v1358
    %v1360 = vrot.slane %v1359, 2
    %v1361 = vadd.f32 %v1359, %v1360
    %v1362 = vrot.slane %v1361, 1
    %v1363 = vadd.f32 %v1361, %v1362
    %v1364 = vsel %vm158, %v1344, 0.0
    %v1365 = vrot.slane %v1364, 4
    %v1366 = vadd.f32 %v1364, %v1365
    %v1367 = vrot.slane %v1366, 2
    %v1368 = vadd.f32 %v1366, %v1367
    %v1369 = vrot.slane %v1368, 1
    %v1370 = vadd.f32 %v1368, %v1369
    %v1371 = vsel %vm158, %v1345, 0.0
    %v1372 = vrot.slane %v1371, 4
    %v1373 = vadd.f32 %v1371, %v1372
    %v1374 = vrot.slane %v1373, 2
    %v1375 = vadd.f32 %v1373, %v1374
    %v1376 = vrot.slane %v1375, 1
    %v1377 = vadd.f32 %v1375, %v1376
    %v1378 = vsel %vm158, %v1346, 0.0
    %v1379 = vrot.slane %v1378, 4
    %v1380 = vadd.f32 %v1378, %v1379
    %v1381 = vrot.slane %v1380, 2
    %v1382 = vadd.f32 %v1380, %v1381
    %v1383 = vrot.slane %v1382, 1
    %v1384 = vadd.f32 %v1382, %v1383
    %v1385 = vsel %vm158, %v1347, 0.0
    %v1386 = vrot.slane %v1385, 4
    %v1387 = vadd.f32 %v1385, %v1386
    %v1388 = vrot.slane %v1387, 2
    %v1389 = vadd.f32 %v1387, %v1388
    %v1390 = vrot.slane %v1389, 1
    %v1391 = vadd.f32 %v1389, %v1390
    %v1392 = vsel %vm158, %v1348, 0.0
    %v1393 = vrot.slane %v1392, 4
    %v1394 = vadd.f32 %v1392, %v1393
    %v1395 = vrot.slane %v1394, 2
    %v1396 = vadd.f32 %v1394, %v1395
    %v1397 = vrot.slane %v1396, 1
    %v1398 = vadd.f32 %v1396, %v1397
    %v1399 = vsel %vm158, %v1349, 0.0
    %v1400 = vrot.slane %v1399, 4
    %v1401 = vadd.f32 %v1399, %v1400
    %v1402 = vrot.slane %v1401, 2
    %v1403 = vadd.f32 %v1401, %v1402
    %v1404 = vrot.slane %v1403, 1
    %v1405 = vadd.f32 %v1403, %v1404
    %1407 = vset.pattern.permute.xlu0 0
    %1408 = vperm.xlu0 %1407, %v1281
    %v1409 = vpop.permute.xlu0 %1408
    %v1419 = vsel %vm303, %v172, %v165
    %v1420 = vsel %vm305, %v179, %v1419
    %v1421 = vsel %vm307, %v186, %v1420
    %v1422 = vsel %vm309, %v193, %v1421
    %v1423 = vsel %vm311, %v200, %v1422
    %v1424 = vsel %vm313, %v207, %v1423
    %v1425 = vsel %vm315, %v214, %v1424
    %v1427 = vmul.f32 %v1409, %v1425
    %v1429 = vrot.slane %v1427, 1
    %v1430 = vrot.slane %v1427, 2
    %v1431 = vrot.slane %v1427, 3
    %v1432 = vrot.slane %v1427, 4
    %v1433 = vrot.slane %v1427, 5
    %v1434 = vrot.slane %v1427, 6
    %v1435 = vrot.slane %v1427, 7
    %v1444 = vadd.f32 %v1356, %v1427
    %v1445 = vadd.f32 %v1363, %v1429
    %v1446 = vadd.f32 %v1370, %v1430
    %v1447 = vadd.f32 %v1377, %v1431
    %v1448 = vadd.f32 %v1384, %v1432
    %v1449 = vadd.f32 %v1391, %v1433
    %v1450 = vadd.f32 %v1398, %v1434
    %v1451 = vadd.f32 %v1405, %v1435
    %v1452 = vlaneseq
    %v1453 = vshrl.u32 %v1452, 7
    %v1454 = vsub.s32 0, %v1453
    %v1455 = vrot.slane %v1444, %v1454
    %v1456 = vlaneseq
    %v1457 = vshrl.u32 %v1456, 7
    %v1458 = vsub.s32 0, %v1457
    %v1459 = vrot.slane %v1445, %v1458
    %v1460 = vlaneseq
    %v1461 = vshrl.u32 %v1460, 7
    %v1462 = vsub.s32 0, %v1461
    %v1463 = vrot.slane %v1446, %v1462
    %v1464 = vlaneseq
    %v1465 = vshrl.u32 %v1464, 7
    %v1466 = vsub.s32 0, %v1465
    %v1467 = vrot.slane %v1447, %v1466
    %v1468 = vlaneseq
    %v1469 = vshrl.u32 %v1468, 7
    %v1470 = vsub.s32 0, %v1469
    %v1471 = vrot.slane %v1448, %v1470
    %v1472 = vlaneseq
    %v1473 = vshrl.u32 %v1472, 7
    %v1474 = vsub.s32 0, %v1473
    %v1475 = vrot.slane %v1449, %v1474
    %v1476 = vlaneseq
    %v1477 = vshrl.u32 %v1476, 7
    %v1478 = vsub.s32 0, %v1477
    %v1479 = vrot.slane %v1450, %v1478
    %v1480 = vlaneseq
    %v1481 = vshrl.u32 %v1480, 7
    %v1482 = vsub.s32 0, %v1481
    %v1483 = vrot.slane %v1451, %v1482
    %v1484 = vmul.f32 %v1455, %v1125
    %v1485 = vmul.f32 %v1459, %v1126
    %v1486 = vmul.f32 %v1463, %v1127
    %v1487 = vmul.f32 %v1467, %v1128
    %v1488 = vmul.f32 %v1471, %v1129
    %v1489 = vmul.f32 %v1475, %v1130
    %v1490 = vmul.f32 %v1479, %v1131
    %v1491 = vmul.f32 %v1483, %v1132
    %v1492 = vsel %vm158, %v1484, 0.0
    %1493 = vadd.xlane.f32.xlu0 %v1492
    %v1494 = vpop.xlane.xlu0 %1493
    %v1495 = vsel %vm158, %v1485, 0.0
    %1496 = vadd.xlane.f32.xlu0 %v1495
    %v1497 = vpop.xlane.xlu0 %1496
    %v1498 = vsel %vm158, %v1486, 0.0
    %1499 = vadd.xlane.f32.xlu0 %v1498
    %v1500 = vpop.xlane.xlu0 %1499
    %v1501 = vsel %vm158, %v1487, 0.0
    %1502 = vadd.xlane.f32.xlu0 %v1501
    %v1503 = vpop.xlane.xlu0 %1502
    %v1504 = vsel %vm158, %v1488, 0.0
    %1505 = vadd.xlane.f32.xlu0 %v1504
    %v1506 = vpop.xlane.xlu0 %1505
    %v1507 = vsel %vm158, %v1489, 0.0
    %1508 = vadd.xlane.f32.xlu0 %v1507
    %v1509 = vpop.xlane.xlu0 %1508
    %v1510 = vsel %vm158, %v1490, 0.0
    %1511 = vadd.xlane.f32.xlu0 %v1510
    %v1512 = vpop.xlane.xlu0 %1511
    %v1513 = vsel %vm158, %v1491, 0.0
    %1514 = vadd.xlane.f32.xlu0 %v1513
    %v1515 = vpop.xlane.xlu0 %1514
    %v1516 = vrcp.pop %v1285
    %v1517 = vmul.f32 0.17677669, %v1516
    %1519 = vset.pattern.permute.xlu0 0
    %1520 = vperm.xlu0 %1519, %v1517
    %v1521 = vpop.permute.xlu0 %1520
    %v1522 = vlaneseq
    %v1523 = vshrl.u32 %v1522, 7
    %v1524 = vsub.s32 0, %v1523
    %v1525 = vrot.slane %v1521, %v1524
    %v1526 = vlaneseq
    %v1527 = vshrl.u32 %v1526, 7
    %v1528 = vsub.s32 1, %v1527
    %v1529 = vrot.slane %v1521, %v1528
    %v1530 = vlaneseq
    %v1531 = vshrl.u32 %v1530, 7
    %v1532 = vsub.s32 2, %v1531
    %v1533 = vrot.slane %v1521, %v1532
    %v1534 = vlaneseq
    %v1535 = vshrl.u32 %v1534, 7
    %v1536 = vsub.s32 3, %v1535
    %v1537 = vrot.slane %v1521, %v1536
    %v1538 = vlaneseq
    %v1539 = vshrl.u32 %v1538, 7
    %v1540 = vsub.s32 4, %v1539
    %v1541 = vrot.slane %v1521, %v1540
    %v1542 = vlaneseq
    %v1543 = vshrl.u32 %v1542, 7
    %v1544 = vsub.s32 5, %v1543
    %v1545 = vrot.slane %v1521, %v1544
    %v1546 = vlaneseq
    %v1547 = vshrl.u32 %v1546, 7
    %v1548 = vsub.s32 6, %v1547
    %v1549 = vrot.slane %v1521, %v1548
    %v1550 = vlaneseq
    %v1551 = vshrl.u32 %v1550, 7
    %v1552 = vsub.s32 7, %v1551
    %v1553 = vrot.slane %v1521, %v1552
    %v1562 = vmul.f32 %v1494, %v1525
    %v1563 = vmul.f32 %v1497, %v1529
    %v1564 = vmul.f32 %v1500, %v1533
    %v1565 = vmul.f32 %v1503, %v1537
    %v1566 = vmul.f32 %v1506, %v1541
    %v1567 = vmul.f32 %v1509, %v1545
    %v1568 = vmul.f32 %v1512, %v1549
    %v1569 = vmul.f32 %v1515, %v1553
    %v1570 = vld [vmem:[#allocation8] sm:$0xff]
    %v1572 = vlaneseq
    %v1573 = vshrl.u32 %v1572, 7
    %v1574 = vsub.s32 0, %v1573
    %v1575 = vrot.slane %v1570, %v1574
    %1577 = vbcast.lane.b32.xlu0 %v1575, 256
    %v1578 = vpop.permute.xlu0 %1577
    %v1579 = vlaneseq
    %v1580 = vshrl.u32 %v1579, 7
    %v1581 = vsub.s32 1, %v1580
    %v1582 = vrot.slane %v1570, %v1581
    %1584 = vbcast.lane.b32.xlu0 %v1582, 256
    %v1585 = vpop.permute.xlu0 %1584
    %v1586 = vlaneseq
    %v1587 = vshrl.u32 %v1586, 7
    %v1588 = vsub.s32 2, %v1587
    %v1589 = vrot.slane %v1570, %v1588
    %1591 = vbcast.lane.b32.xlu0 %v1589, 256
    %v1592 = vpop.permute.xlu0 %1591
    %v1593 = vlaneseq
    %v1594 = vshrl.u32 %v1593, 7
    %v1595 = vsub.s32 3, %v1594
    %v1596 = vrot.slane %v1570, %v1595
    %1598 = vbcast.lane.b32.xlu0 %v1596, 256
    %v1599 = vpop.permute.xlu0 %1598
    %v1600 = vlaneseq
    %v1601 = vshrl.u32 %v1600, 7
    %v1602 = vsub.s32 4, %v1601
    %v1603 = vrot.slane %v1570, %v1602
    %1605 = vbcast.lane.b32.xlu0 %v1603, 256
    %v1606 = vpop.permute.xlu0 %1605
    %v1607 = vlaneseq
    %v1608 = vshrl.u32 %v1607, 7
    %v1609 = vsub.s32 5, %v1608
    %v1610 = vrot.slane %v1570, %v1609
    %1612 = vbcast.lane.b32.xlu0 %v1610, 256
    %v1613 = vpop.permute.xlu0 %1612
    %v1614 = vlaneseq
    %v1615 = vshrl.u32 %v1614, 7
    %v1616 = vsub.s32 6, %v1615
    %v1617 = vrot.slane %v1570, %v1616
    %1619 = vbcast.lane.b32.xlu0 %v1617, 256
    %v1620 = vpop.permute.xlu0 %1619
    %v1621 = vlaneseq
    %v1622 = vshrl.u32 %v1621, 7
    %v1623 = vsub.s32 7, %v1622
    %v1624 = vrot.slane %v1570, %v1623
    %1626 = vbcast.lane.b32.xlu0 %v1624, 256
    %v1627 = vpop.permute.xlu0 %1626
    %v1636 = vmul.f32 %v540, %v1578
    %v1637 = vmul.f32 %v541, %v1585
    %v1638 = vmul.f32 %v542, %v1592
    %v1639 = vmul.f32 %v543, %v1599
    %v1640 = vmul.f32 %v544, %v1606
    %v1641 = vmul.f32 %v545, %v1613
    %v1642 = vmul.f32 %v546, %v1620
    %v1643 = vmul.f32 %v547, %v1627
    %v1644 = vmul.f32 %v1562, %v1578
    %v1645 = vmul.f32 %v1563, %v1585
    %v1646 = vmul.f32 %v1564, %v1592
    %v1647 = vmul.f32 %v1565, %v1599
    %v1648 = vmul.f32 %v1566, %v1606
    %v1649 = vmul.f32 %v1567, %v1613
    %v1650 = vmul.f32 %v1568, %v1620
    %v1651 = vmul.f32 %v1569, %v1627
    %v1652 = vld [vmem:[#allocation10] sm:$0xf]
    %v1653 = vlaneseq
    %v1654 = vshrl.u32 %v1653, 7
    %v1655 = vsub.s32 0, %v1654
    %v1656 = vrot.slane %v1652, %v1655
    %1659 = vbcast.lane.b32.xlu0 %v1656, 256
    %v1660 = vpop.permute.xlu0 %1659
    %v1662 = vmul.f32 %v1636, %v1660
    %v1663 = vmul.f32 %v1637, %v1660
    %v1664 = vmul.f32 %v1638, %v1660
    %v1665 = vmul.f32 %v1639, %v1660
    %v1666 = vmul.f32 %v1640, %v1660
    %v1667 = vmul.f32 %v1641, %v1660
    %v1668 = vmul.f32 %v1642, %v1660
    %v1669 = vmul.f32 %v1643, %v1660
    %v1670 = vlaneseq
    %v1671 = vshrl.u32 %v1670, 7
    %v1672 = vsub.s32 2, %v1671
    %v1673 = vrot.slane %v1652, %v1672
    %1676 = vbcast.lane.b32.xlu0 %v1673, 256
    %v1677 = vpop.permute.xlu0 %1676
    %v1679 = vmul.f32 %v1644, %v1677
    %v1680 = vmul.f32 %v1645, %v1677
    %v1681 = vmul.f32 %v1646, %v1677
    %v1682 = vmul.f32 %v1647, %v1677
    %v1683 = vmul.f32 %v1648, %v1677
    %v1684 = vmul.f32 %v1649, %v1677
    %v1685 = vmul.f32 %v1650, %v1677
    %v1686 = vmul.f32 %v1651, %v1677
    %v1687 = vadd.f32 %v1662, %v1679
    %v1688 = vadd.f32 %v1663, %v1680
    %v1689 = vadd.f32 %v1664, %v1681
    %v1690 = vadd.f32 %v1665, %v1682
    %v1691 = vadd.f32 %v1666, %v1683
    %v1692 = vadd.f32 %v1667, %v1684
    %v1693 = vadd.f32 %v1668, %v1685
    %v1694 = vadd.f32 %v1669, %v1686
    %1703 = vset.pattern.permute.xlu0 0
    %1704 = vperm.xlu0 %1703, %v1687
    %v1705 = vpop.permute.xlu0 %1704
    %1706 = vset.pattern.permute.xlu0 0
    %1707 = vperm.xlu0 %1706, %v1688
    %v1708 = vpop.permute.xlu0 %1707
    %1709 = vset.pattern.permute.xlu0 0
    %1710 = vperm.xlu0 %1709, %v1689
    %v1711 = vpop.permute.xlu0 %1710
    %1712 = vset.pattern.permute.xlu0 0
    %1713 = vperm.xlu0 %1712, %v1690
    %v1714 = vpop.permute.xlu0 %1713
    %1715 = vset.pattern.permute.xlu0 0
    %1716 = vperm.xlu0 %1715, %v1691
    %v1717 = vpop.permute.xlu0 %1716
    %1718 = vset.pattern.permute.xlu0 0
    %1719 = vperm.xlu0 %1718, %v1692
    %v1720 = vpop.permute.xlu0 %1719
    %1721 = vset.pattern.permute.xlu0 0
    %1722 = vperm.xlu0 %1721, %v1693
    %v1723 = vpop.permute.xlu0 %1722
    %1724 = vset.pattern.permute.xlu0 0
    %1725 = vperm.xlu0 %1724, %v1694
    %v1726 = vpop.permute.xlu0 %1725
    %v1727 = vlaneseq
    %v1728 = vshrl.u32 %v1727, 7
    %v1729 = vsub.s32 %v270, %v1728
    %v1730 = vrot.slane %v1705, %v1729
    %v1731 = vlaneseq
    %v1732 = vshrl.u32 %v1731, 7
    %v1733 = vsub.s32 %v270, %v1732
    %v1734 = vrot.slane %v1708, %v1733
    %v1735 = vlaneseq
    %v1736 = vshrl.u32 %v1735, 7
    %v1737 = vsub.s32 %v270, %v1736
    %v1738 = vrot.slane %v1711, %v1737
    %v1739 = vlaneseq
    %v1740 = vshrl.u32 %v1739, 7
    %v1741 = vsub.s32 %v270, %v1740
    %v1742 = vrot.slane %v1714, %v1741
    %v1743 = vlaneseq
    %v1744 = vshrl.u32 %v1743, 7
    %v1745 = vsub.s32 %v270, %v1744
    %v1746 = vrot.slane %v1717, %v1745
    %v1747 = vlaneseq
    %v1748 = vshrl.u32 %v1747, 7
    %v1749 = vsub.s32 %v270, %v1748
    %v1750 = vrot.slane %v1720, %v1749
    %v1751 = vlaneseq
    %v1752 = vshrl.u32 %v1751, 7
    %v1753 = vsub.s32 %v270, %v1752
    %v1754 = vrot.slane %v1723, %v1753
    %v1755 = vlaneseq
    %v1756 = vshrl.u32 %v1755, 7
    %v1757 = vsub.s32 %v270, %v1756
    %v1758 = vrot.slane %v1726, %v1757
    %v1759 = vsel %vm303, %v1734, %v1730
    %v1760 = vsel %vm305, %v1738, %v1759
    %v1761 = vsel %vm307, %v1742, %v1760
    %v1762 = vsel %vm309, %v1746, %v1761
    %v1763 = vsel %vm311, %v1750, %v1762
    %v1764 = vsel %vm313, %v1754, %v1763
    %v1765 = vsel %vm315, %v1758, %v1764
    %v1767 = vsel %vm319, %v1765, 0.0
    %1768 = vadd.xlane.f32.xlu0 %v1767
    %v1769 = vpop.xlane.xlu0 %1768
    %v1770 = vstv %s115
    %v1771 = vadd.f32 %v1769, %v1770
    %v1772 = vlaneseq
    %v1773 = vshrl.u32 %v1772, 7
    %v1774 = vsub.s32 1, %v1773
    %v1775 = vrot.slane %v1652, %v1774
    %1778 = vbcast.lane.b32.xlu0 %v1775, 256
    %v1779 = vpop.permute.xlu0 %1778
    %v1781 = vmul.f32 %v1636, %v1779
    %v1782 = vmul.f32 %v1637, %v1779
    %v1783 = vmul.f32 %v1638, %v1779
    %v1784 = vmul.f32 %v1639, %v1779
    %v1785 = vmul.f32 %v1640, %v1779
    %v1786 = vmul.f32 %v1641, %v1779
    %v1787 = vmul.f32 %v1642, %v1779
    %v1788 = vmul.f32 %v1643, %v1779
    %v1789 = vlaneseq
    %v1790 = vshrl.u32 %v1789, 7
    %v1791 = vsub.s32 3, %v1790
    %v1792 = vrot.slane %v1652, %v1791
    %1795 = vbcast.lane.b32.xlu0 %v1792, 256
    %v1796 = vpop.permute.xlu0 %1795
    %v1798 = vmul.f32 %v1644, %v1796
    %v1799 = vmul.f32 %v1645, %v1796
    %v1800 = vmul.f32 %v1646, %v1796
    %v1801 = vmul.f32 %v1647, %v1796
    %v1802 = vmul.f32 %v1648, %v1796
    %v1803 = vmul.f32 %v1649, %v1796
    %v1804 = vmul.f32 %v1650, %v1796
    %v1805 = vmul.f32 %v1651, %v1796
    %v1806 = vadd.f32 %v1781, %v1798
    %v1807 = vadd.f32 %v1782, %v1799
    %v1808 = vadd.f32 %v1783, %v1800
    %v1809 = vadd.f32 %v1784, %v1801
    %v1810 = vadd.f32 %v1785, %v1802
    %v1811 = vadd.f32 %v1786, %v1803
    %v1812 = vadd.f32 %v1787, %v1804
    %v1813 = vadd.f32 %v1788, %v1805
    %1822 = vset.pattern.permute.xlu0 0
    %1823 = vperm.xlu0 %1822, %v1806
    %v1824 = vpop.permute.xlu0 %1823
    %1825 = vset.pattern.permute.xlu0 0
    %1826 = vperm.xlu0 %1825, %v1807
    %v1827 = vpop.permute.xlu0 %1826
    %1828 = vset.pattern.permute.xlu0 0
    %1829 = vperm.xlu0 %1828, %v1808
    %v1830 = vpop.permute.xlu0 %1829
    %1831 = vset.pattern.permute.xlu0 0
    %1832 = vperm.xlu0 %1831, %v1809
    %v1833 = vpop.permute.xlu0 %1832
    %1834 = vset.pattern.permute.xlu0 0
    %1835 = vperm.xlu0 %1834, %v1810
    %v1836 = vpop.permute.xlu0 %1835
    %1837 = vset.pattern.permute.xlu0 0
    %1838 = vperm.xlu0 %1837, %v1811
    %v1839 = vpop.permute.xlu0 %1838
    %1840 = vset.pattern.permute.xlu0 0
    %1841 = vperm.xlu0 %1840, %v1812
    %v1842 = vpop.permute.xlu0 %1841
    %1843 = vset.pattern.permute.xlu0 0
    %1844 = vperm.xlu0 %1843, %v1813
    %v1845 = vpop.permute.xlu0 %1844
    %v1846 = vlaneseq
    %v1847 = vshrl.u32 %v1846, 7
    %v1848 = vsub.s32 %v270, %v1847
    %v1849 = vrot.slane %v1824, %v1848
    %v1850 = vlaneseq
    %v1851 = vshrl.u32 %v1850, 7
    %v1852 = vsub.s32 %v270, %v1851
    %v1853 = vrot.slane %v1827, %v1852
    %v1854 = vlaneseq
    %v1855 = vshrl.u32 %v1854, 7
    %v1856 = vsub.s32 %v270, %v1855
    %v1857 = vrot.slane %v1830, %v1856
    %v1858 = vlaneseq
    %v1859 = vshrl.u32 %v1858, 7
    %v1860 = vsub.s32 %v270, %v1859
    %v1861 = vrot.slane %v1833, %v1860
    %v1862 = vlaneseq
    %v1863 = vshrl.u32 %v1862, 7
    %v1864 = vsub.s32 %v270, %v1863
    %v1865 = vrot.slane %v1836, %v1864
    %v1866 = vlaneseq
    %v1867 = vshrl.u32 %v1866, 7
    %v1868 = vsub.s32 %v270, %v1867
    %v1869 = vrot.slane %v1839, %v1868
    %v1870 = vlaneseq
    %v1871 = vshrl.u32 %v1870, 7
    %v1872 = vsub.s32 %v270, %v1871
    %v1873 = vrot.slane %v1842, %v1872
    %v1874 = vlaneseq
    %v1875 = vshrl.u32 %v1874, 7
    %v1876 = vsub.s32 %v270, %v1875
    %v1877 = vrot.slane %v1845, %v1876
    %v1878 = vsel %vm303, %v1853, %v1849
    %v1879 = vsel %vm305, %v1857, %v1878
    %v1880 = vsel %vm307, %v1861, %v1879
    %v1881 = vsel %vm309, %v1865, %v1880
    %v1882 = vsel %vm311, %v1869, %v1881
    %v1883 = vsel %vm313, %v1873, %v1882
    %v1884 = vsel %vm315, %v1877, %v1883
    %v1886 = vsel %vm319, %v1884, 0.0
    %1887 = vadd.xlane.f32.xlu0 %v1886
    %v1888 = vpop.xlane.xlu0 %1887
    %v1889 = vstv %s116
    %v1890 = vadd.f32 %v1888, %v1889
    %vm1891 = vcmask 7168
    %v1892 = vsel %vm1891, %v1771, %v1890
    %vm1893 = vcmask 15360
    %1894 = vst.msk [vmem:[%s10] sm:$0xff] %vm1893, %v1892
    // Predicated region
    $region66: #{tpu_custom_call.1} parent=1 // pred_check
      _
    $region67: #{tpu_custom_call.1} parent=1 // pred_check_branch
      %1896 = sbr.rel (0) target = $region69
    $region68: #{tpu_custom_call.1} parent=1 // pred_region
      _
    $region69: #{tpu_custom_call.1} parent=1 // pred_fallthru
      _
    // Predicated region
    $region70: #{tpu_custom_call.1} parent=1 // pred_check
      _
    $region71: #{tpu_custom_call.1} parent=1 // pred_check_branch
      %1898 = sbr.rel (0) target = $region73
    $region72: #{tpu_custom_call.1} parent=1 // pred_region
      _
    $region73: #{tpu_custom_call.1} parent=1 // pred_fallthru
      _
    %1899 = vsyncpa [#allocation3], 1
    %1900 = vsyncpa [#allocation6], 1
    %1901 = vsyncpa [#allocation9], 1
    %1902 = vsyncpa [#allocation4], 1

</llo_original>
